<compile_context>
chip_gen: v7x
topology: tpu7x:2x2x1
jax: 0.10.0
libtpu: 0.0.40
codegen_flags: <defaults>
</compile_context>

<pallas_src>
import functools
import math

import jax
import jax.numpy as jnp
from jax.experimental import pallas as pl
from jax.experimental.pallas import tpu as pltpu

EPS = 1.1920929e-07  # torch.finfo(torch.float32).eps -> nn.RMSNorm default eps
NEG_INF = -1e30


def _attention_kernel(qin_ref, kin_ref, vin_ref,
                      gq_ref, gk_ref, gv_ref,
                      wq_ref, wk_ref, wv_ref, wo_ref,
                      cos_ref, sin_ref,
                      o_ref, *, heads, dim_head):
    """One batch element: RMSNorm -> fused QKV proj -> per-head rotary + causal
    SDPA -> fused output projection.  bf16 MXU operands, f32 accumulation,
    f32 softmax."""
    dh = dim_head
    half = dh // 2
    scale = 1.0 / math.sqrt(dh)

    def rmsnorm(x, g):  # keep the mean-of-squares in f32 (cast only afterwards)
        ms = jnp.mean(x * x, axis=-1, keepdims=True)
        return x * jax.lax.rsqrt(ms + EPS) * g

    xq = rmsnorm(qin_ref[0], gq_ref[...]).astype(jnp.bfloat16)   # (N, D)
    xk = rmsnorm(kin_ref[0], gk_ref[...]).astype(jnp.bfloat16)
    xv = rmsnorm(vin_ref[0], gv_ref[...]).astype(jnp.bfloat16)

    # Head-fused projections: one lane-dense (N, D) @ (D, H*Dh) per stream.
    qa = jnp.dot(xq, wq_ref[...], preferred_element_type=jnp.float32)  # (N, H*Dh)
    ka = jnp.dot(xk, wk_ref[...], preferred_element_type=jnp.float32)
    va = jnp.dot(xv, wv_ref[...], preferred_element_type=jnp.float32)

    cos = cos_ref[...]   # (N, Dh)
    sin = sin_ref[...]   # signed: [-sin | +sin]

    # Causal mask built once and reused by every head.
    n = qa.shape[0]
    row = jax.lax.broadcasted_iota(jnp.int32, (n, n), 0)
    col = jax.lax.broadcasted_iota(jnp.int32, (n, n), 1)
    causal = col <= row

    def rope(x):  # half-swap formulation of interleaved RoPE (permuted space)
        swapped = jnp.concatenate([x[:, half:], x[:, :half]], axis=-1)
        return x * cos + swapped * sin

    outs = []
    for h in range(heads):  # static unroll; scores are inherently per-head
        sl = slice(h * dh, (h + 1) * dh)
        qh = rope(qa[:, sl])
        kh = rope(ka[:, sl])
        vh = va[:, sl]

        # q . k^T without materializing k.T (contract dim 1 of both operands).
        s = jax.lax.dot_general(
            qh.astype(jnp.bfloat16), kh.astype(jnp.bfloat16),
            dimension_numbers=(((1,), (1,)), ((), ())),
            preferred_element_type=jnp.float32) * scale          # (N, N) f32
        s = jnp.where(causal, s, NEG_INF)                        # mask in f32

        m = jnp.max(s, axis=-1, keepdims=True)
        e = jnp.exp(s - m)
        p = e * pl.reciprocal(jnp.sum(e, axis=-1, keepdims=True), approx=True)

        outs.append(jnp.dot(p.astype(jnp.bfloat16), vh.astype(jnp.bfloat16),
                            preferred_element_type=jnp.float32))  # (N, Dh)

    # Head-fused output projection, output tile written exactly once.
    o_all = jnp.concatenate(outs, axis=-1).astype(jnp.bfloat16)   # (N, H*Dh)
    o_ref[...] = jnp.dot(o_all, wo_ref[...],
                         preferred_element_type=jnp.float32)[None]


def attention_forward(q_in, k_in, v_in, params, *, heads, dim_head):
    B, N, D = q_in.shape
    Hd = heads * dim_head

    kernel = functools.partial(_attention_kernel, heads=heads, dim_head=dim_head)
    return pl.pallas_call(
        kernel,
        out_shape=jax.ShapeDtypeStruct((B, N, D), jnp.float32),
        grid=(B,),
        in_specs=[
            pl.BlockSpec((1, N, D), lambda b: (b, 0, 0)),        # q_input
            pl.BlockSpec((1, N, D), lambda b: (b, 0, 0)),        # k_input
            pl.BlockSpec((1, N, D), lambda b: (b, 0, 0)),        # v_input
            pl.BlockSpec((1, D), lambda b: (0, 0)),              # RMSNorm gamma (q)
            pl.BlockSpec((1, D), lambda b: (0, 0)),              # RMSNorm gamma (k)
            pl.BlockSpec((1, D), lambda b: (0, 0)),              # RMSNorm gamma (v)
            pl.BlockSpec((D, Hd), lambda b: (0, 0)),             # W_q fused (bf16, permuted)
            pl.BlockSpec((D, Hd), lambda b: (0, 0)),             # W_k fused (bf16, permuted)
            pl.BlockSpec((D, Hd), lambda b: (0, 0)),             # W_v fused (bf16)
            pl.BlockSpec((Hd, D), lambda b: (0, 0)),             # W_out fused (bf16)
            pl.BlockSpec((N, dim_head), lambda b: (0, 0)),       # cos table
            pl.BlockSpec((N, dim_head), lambda b: (0, 0)),       # signed sin table
        ],
        out_specs=pl.BlockSpec((1, N, D), lambda b: (b, 0, 0)),
        compiler_params=pltpu.CompilerParams(
            dimension_semantics=("parallel",)),
    )(q_in, k_in, v_in,
      params["gq"], params["gk"], params["gv"],
      params["wq"], params["wk"], params["wv"], params["wo"],
      params["cos"], params["sin"])


def make_params(key, dim, heads, dim_head, seq_len, theta=10000.0):
    """Deterministic synthetic parameters + precomputed rotary tables."""
    D, H, Dh = dim, heads, dim_head
    dim_inner = H * Dh
    k1, k2, k3, k4 = jax.random.split(key, 4)

    wq_full = jax.random.normal(k1, (D, dim_inner), jnp.float32) * 0.05
    wk_full = jax.random.normal(k2, (D, dim_inner), jnp.float32) * 0.05
    wv_full = jax.random.normal(k3, (D, dim_inner), jnp.float32) * 0.05
    wo_full = jax.random.normal(k4, (dim_inner, D), jnp.float32) * 0.05

    # RMSNorm weights: PyTorch default init (ones).
    gq = jnp.ones((1, D), jnp.float32)
    gk = jnp.ones((1, D), jnp.float32)
    gv = jnp.ones((1, D), jnp.float32)

    # Per-head column permutation: interleaved (x0,x1,x2,...) -> evens-first.
    perm = jnp.concatenate([jnp.arange(0, Dh, 2), jnp.arange(1, Dh, 2)])

    def permute_heads(w_full):
        w = w_full.reshape(D, H, Dh)[:, :, perm]
        return w.reshape(D, H * Dh)

    # bf16 weight copies for the kernel (MXU operands / half the HBM traffic);
    # f32 originals are kept for the pure-JAX reference.
    wq = permute_heads(wq_full).astype(jnp.bfloat16)
    wk = permute_heads(wk_full).astype(jnp.bfloat16)
    wv = wv_full.astype(jnp.bfloat16)
    wo = wo_full.astype(jnp.bfloat16)

    # Rotary tables in the permuted / half-split space.
    inv_freq = 1.0 / (theta ** (jnp.arange(0, Dh, 2, dtype=jnp.float32) / Dh))
    t = jnp.arange(seq_len, dtype=jnp.float32)
    ang = t[:, None] * inv_freq[None, :]                              # (N, Dh/2)
    cos = jnp.concatenate([jnp.cos(ang), jnp.cos(ang)], axis=-1)      # (N, Dh)
    sin = jnp.concatenate([-jnp.sin(ang), jnp.sin(ang)], axis=-1)     # signed

    return {
        "gq": gq, "gk": gk, "gv": gv,
        "wq": wq, "wk": wk, "wv": wv, "wo": wo,
        "cos": cos, "sin": sin,
        "wq_full": wq_full, "wk_full": wk_full,
        "wv_full": wv_full, "wo_full": wo_full,
    }


def reference_forward(q_in, k_in, v_in, params, heads, dim_head, theta=10000.0):
    """Pure-JAX f32 reference matching the PyTorch module (interleaved rotary)."""
    B, N, D = q_in.shape
    H, Dh = heads, dim_head

    def rms(x, g):
        return x * jax.lax.rsqrt(jnp.mean(x * x, -1, keepdims=True) + EPS) * g

    q = rms(q_in, params["gq"][0]) @ params["wq_full"]
    k = rms(k_in, params["gk"][0]) @ params["wk_full"]
    v = rms(v_in, params["gv"][0]) @ params["wv_full"]

    def split(t):
        return t.reshape(B, N, H, Dh).transpose(0, 2, 1, 3)       # (B,H,N,Dh)

    q, k, v = map(split, (q, k, v))

    half = Dh // 2
    inv_freq = 1.0 / (theta ** (jnp.arange(0, Dh, 2, dtype=jnp.float32) / Dh))
    ang = jnp.arange(N, dtype=jnp.float32)[:, None] * inv_freq[None, :]
    cos = jnp.repeat(jnp.cos(ang), 2, axis=-1)                    # interleaved dup
    sin = jnp.repeat(jnp.sin(ang), 2, axis=-1)

    def rotate_half(x):
        xr = x.reshape(*x.shape[:-1], half, 2)
        x1, x2 = xr[..., 0], xr[..., 1]
        return jnp.stack([-x2, x1], axis=-1).reshape(x.shape)

    q = q * cos + rotate_half(q) * sin
    k = k * cos + rotate_half(k) * sin

    s = jnp.einsum("bhnd,bhmd->bhnm", q, k) / math.sqrt(Dh)
    mask = jnp.tril(jnp.ones((N, N), bool))
    s = jnp.where(mask, s, -jnp.inf)
    p = jax.nn.softmax(s, axis=-1)
    o = jnp.einsum("bhnm,bhmd->bhnd", p, v)
    o = o.transpose(0, 2, 1, 3).reshape(B, N, H * Dh)
    return o @ params["wo_full"]


if __name__ == "__main__":
    B, N, D = 2, 8, 32
    heads, dim_head = 4, 8

    key = jax.random.PRNGKey(0)
    kq, kk, kv, kp = jax.random.split(key, 4)
    q_in = jax.random.normal(kq, (B, N, D), jnp.float32)
    k_in = jax.random.normal(kk, (B, N, D), jnp.float32)
    v_in = jax.random.normal(kv, (B, N, D), jnp.float32)

    params = make_params(kp, D, heads, dim_head, N)

    out = attention_forward(q_in, k_in, v_in, params,
                            heads=heads, dim_head=dim_head)
    out = jax.block_until_ready(out)

    ref = reference_forward(q_in, k_in, v_in, params, heads, dim_head)
    # Kernel runs matmuls with bf16 operands (f32 accumulation), so allow
    # bf16-level tolerance against the pure-f32 reference.
    if not jnp.allclose(out, ref, atol=2e-2, rtol=2e-2):
        max_err = float(jnp.max(jnp.abs(out - ref)))
        raise AssertionError(f"Pallas kernel does not match reference "
                             f"(max abs err = {max_err:.3e})")

    print("KERNEL_OK")
</pallas_src>

<mosaic_0001>
module attributes {stable_mosaic.version = 11 : i64} {
  func.func @_attention_kernel(%arg0: i32, %arg1: memref<1x8x32xf32, #tpu.memory_space<vmem>>, %arg2: memref<1x8x32xf32, #tpu.memory_space<vmem>>, %arg3: memref<1x8x32xf32, #tpu.memory_space<vmem>>, %arg4: memref<1x32xf32, #tpu.memory_space<vmem>>, %arg5: memref<1x32xf32, #tpu.memory_space<vmem>>, %arg6: memref<1x32xf32, #tpu.memory_space<vmem>>, %arg7: memref<32x32xbf16, #tpu.memory_space<vmem>>, %arg8: memref<32x32xbf16, #tpu.memory_space<vmem>>, %arg9: memref<32x32xbf16, #tpu.memory_space<vmem>>, %arg10: memref<32x32xbf16, #tpu.memory_space<vmem>>, %arg11: memref<8x8xf32, #tpu.memory_space<vmem>>, %arg12: memref<8x8xf32, #tpu.memory_space<vmem>>, %arg13: memref<1x8x32xf32, #tpu.memory_space<vmem>>) attributes {dimension_semantics = [#tpu.dimension_semantics<parallel>], iteration_bounds = array<i64: 2>, scalar_prefetch = 0 : i64, scratch_operands = 0 : i64, tpu.core_type = #tpu.core_type<tc>, window_params = [{transform_indices = @transform_0, window_bounds = array<i64: 1, 8, 32>}, {transform_indices = @transform_1, window_bounds = array<i64: 1, 8, 32>}, {transform_indices = @transform_2, window_bounds = array<i64: 1, 8, 32>}, {pipeline_mode = #tpu.pipeline_mode<synchronous>, transform_indices = @transform_3, window_bounds = array<i64: 1, 32>}, {pipeline_mode = #tpu.pipeline_mode<synchronous>, transform_indices = @transform_4, window_bounds = array<i64: 1, 32>}, {pipeline_mode = #tpu.pipeline_mode<synchronous>, transform_indices = @transform_5, window_bounds = array<i64: 1, 32>}, {pipeline_mode = #tpu.pipeline_mode<synchronous>, transform_indices = @transform_6, window_bounds = array<i64: 32, 32>}, {pipeline_mode = #tpu.pipeline_mode<synchronous>, transform_indices = @transform_7, window_bounds = array<i64: 32, 32>}, {pipeline_mode = #tpu.pipeline_mode<synchronous>, transform_indices = @transform_8, window_bounds = array<i64: 32, 32>}, {pipeline_mode = #tpu.pipeline_mode<synchronous>, transform_indices = @transform_9, window_bounds = array<i64: 32, 32>}, {pipeline_mode = #tpu.pipeline_mode<synchronous>, transform_indices = @transform_10, window_bounds = array<i64: 8, 8>}, {pipeline_mode = #tpu.pipeline_mode<synchronous>, transform_indices = @transform_11, window_bounds = array<i64: 8, 8>}, {transform_indices = @transform_12, window_bounds = array<i64: 1, 8, 32>}]} {
    %c0 = arith.constant 0 : index
    %c0_0 = arith.constant 0 : index
    %c0_1 = arith.constant 0 : index
    %0 = vector.load %arg1[%c0, %c0_0, %c0_1] : memref<1x8x32xf32, #tpu.memory_space<vmem>>, vector<1x8x32xf32>
    %1 = vector.shape_cast %0 : vector<1x8x32xf32> to vector<8x32xf32>
    %c0_2 = arith.constant 0 : index
    %c0_3 = arith.constant 0 : index
    %2 = vector.load %arg4[%c0_2, %c0_3] : memref<1x32xf32, #tpu.memory_space<vmem>>, vector<1x32xf32>
    %3 = arith.mulf %1, %1 : vector<8x32xf32>
    %cst = arith.constant dense<0.000000e+00> : vector<8xf32>
    %4 = vector.multi_reduction <add>, %3, %cst [1] : vector<8x32xf32> to vector<8xf32>
    %5 = vector.shape_cast %4 : vector<8xf32> to vector<8x1xf32>
    %cst_4 = arith.constant 3.200000e+01 : f32
    %6 = vector.broadcast %cst_4 : f32 to vector<8x1xf32>
    %7 = arith.divf %5, %6 : vector<8x1xf32>
    %cst_5 = arith.constant 1.1920929E-7 : f32
    %8 = vector.broadcast %cst_5 : f32 to vector<8x1xf32>
    %9 = arith.addf %7, %8 : vector<8x1xf32>
    %10 = math.rsqrt %9 : vector<8x1xf32>
    %11 = vector.broadcast %10 : vector<8x1xf32> to vector<8x32xf32>
    %12 = arith.mulf %1, %11 : vector<8x32xf32>
    %13 = vector.broadcast %2 : vector<1x32xf32> to vector<8x32xf32>
    %14 = arith.mulf %12, %13 : vector<8x32xf32>
    %15 = arith.truncf %14 : vector<8x32xf32> to vector<8x32xbf16>
    %c0_6 = arith.constant 0 : index
    %c0_7 = arith.constant 0 : index
    %c0_8 = arith.constant 0 : index
    %16 = vector.load %arg2[%c0_6, %c0_7, %c0_8] : memref<1x8x32xf32, #tpu.memory_space<vmem>>, vector<1x8x32xf32>
    %17 = vector.shape_cast %16 : vector<1x8x32xf32> to vector<8x32xf32>
    %c0_9 = arith.constant 0 : index
    %c0_10 = arith.constant 0 : index
    %18 = vector.load %arg5[%c0_9, %c0_10] : memref<1x32xf32, #tpu.memory_space<vmem>>, vector<1x32xf32>
    %19 = arith.mulf %17, %17 : vector<8x32xf32>
    %cst_11 = arith.constant dense<0.000000e+00> : vector<8xf32>
    %20 = vector.multi_reduction <add>, %19, %cst_11 [1] : vector<8x32xf32> to vector<8xf32>
    %21 = vector.shape_cast %20 : vector<8xf32> to vector<8x1xf32>
    %cst_12 = arith.constant 3.200000e+01 : f32
    %22 = vector.broadcast %cst_12 : f32 to vector<8x1xf32>
    %23 = arith.divf %21, %22 : vector<8x1xf32>
    %cst_13 = arith.constant 1.1920929E-7 : f32
    %24 = vector.broadcast %cst_13 : f32 to vector<8x1xf32>
    %25 = arith.addf %23, %24 : vector<8x1xf32>
    %26 = math.rsqrt %25 : vector<8x1xf32>
    %27 = vector.broadcast %26 : vector<8x1xf32> to vector<8x32xf32>
    %28 = arith.mulf %17, %27 : vector<8x32xf32>
    %29 = vector.broadcast %18 : vector<1x32xf32> to vector<8x32xf32>
    %30 = arith.mulf %28, %29 : vector<8x32xf32>
    %31 = arith.truncf %30 : vector<8x32xf32> to vector<8x32xbf16>
    %c0_14 = arith.constant 0 : index
    %c0_15 = arith.constant 0 : index
    %c0_16 = arith.constant 0 : index
    %32 = vector.load %arg3[%c0_14, %c0_15, %c0_16] : memref<1x8x32xf32, #tpu.memory_space<vmem>>, vector<1x8x32xf32>
    %33 = vector.shape_cast %32 : vector<1x8x32xf32> to vector<8x32xf32>
    %c0_17 = arith.constant 0 : index
    %c0_18 = arith.constant 0 : index
    %34 = vector.load %arg6[%c0_17, %c0_18] : memref<1x32xf32, #tpu.memory_space<vmem>>, vector<1x32xf32>
    %35 = arith.mulf %33, %33 : vector<8x32xf32>
    %cst_19 = arith.constant dense<0.000000e+00> : vector<8xf32>
    %36 = vector.multi_reduction <add>, %35, %cst_19 [1] : vector<8x32xf32> to vector<8xf32>
    %37 = vector.shape_cast %36 : vector<8xf32> to vector<8x1xf32>
    %cst_20 = arith.constant 3.200000e+01 : f32
    %38 = vector.broadcast %cst_20 : f32 to vector<8x1xf32>
    %39 = arith.divf %37, %38 : vector<8x1xf32>
    %cst_21 = arith.constant 1.1920929E-7 : f32
    %40 = vector.broadcast %cst_21 : f32 to vector<8x1xf32>
    %41 = arith.addf %39, %40 : vector<8x1xf32>
    %42 = math.rsqrt %41 : vector<8x1xf32>
    %43 = vector.broadcast %42 : vector<8x1xf32> to vector<8x32xf32>
    %44 = arith.mulf %33, %43 : vector<8x32xf32>
    %45 = vector.broadcast %34 : vector<1x32xf32> to vector<8x32xf32>
    %46 = arith.mulf %44, %45 : vector<8x32xf32>
    %47 = arith.truncf %46 : vector<8x32xf32> to vector<8x32xbf16>
    %c0_22 = arith.constant 0 : index
    %c0_23 = arith.constant 0 : index
    %48 = vector.load %arg7[%c0_22, %c0_23] : memref<32x32xbf16, #tpu.memory_space<vmem>>, vector<32x32xbf16>
    %cst_24 = arith.constant dense<0.000000e+00> : vector<8x32xf32>
    %49 = tpu.matmul %15, %48, %cst_24 {dimension_numbers = #tpu.dot_dimension_numbers<[1], [0], [0], [1], [0, 0, 1, 1], [], []>} : vector<8x32xbf16>, vector<32x32xbf16>, vector<8x32xf32> -> vector<8x32xf32>
    %c0_25 = arith.constant 0 : index
    %c0_26 = arith.constant 0 : index
    %50 = vector.load %arg8[%c0_25, %c0_26] : memref<32x32xbf16, #tpu.memory_space<vmem>>, vector<32x32xbf16>
    %cst_27 = arith.constant dense<0.000000e+00> : vector<8x32xf32>
    %51 = tpu.matmul %31, %50, %cst_27 {dimension_numbers = #tpu.dot_dimension_numbers<[1], [0], [0], [1], [0, 0, 1, 1], [], []>} : vector<8x32xbf16>, vector<32x32xbf16>, vector<8x32xf32> -> vector<8x32xf32>
    %c0_28 = arith.constant 0 : index
    %c0_29 = arith.constant 0 : index
    %52 = vector.load %arg9[%c0_28, %c0_29] : memref<32x32xbf16, #tpu.memory_space<vmem>>, vector<32x32xbf16>
    %cst_30 = arith.constant dense<0.000000e+00> : vector<8x32xf32>
    %53 = tpu.matmul %47, %52, %cst_30 {dimension_numbers = #tpu.dot_dimension_numbers<[1], [0], [0], [1], [0, 0, 1, 1], [], []>} : vector<8x32xbf16>, vector<32x32xbf16>, vector<8x32xf32> -> vector<8x32xf32>
    %c0_31 = arith.constant 0 : index
    %c0_32 = arith.constant 0 : index
    %54 = vector.load %arg11[%c0_31, %c0_32] : memref<8x8xf32, #tpu.memory_space<vmem>>, vector<8x8xf32>
    %c0_33 = arith.constant 0 : index
    %c0_34 = arith.constant 0 : index
    %55 = vector.load %arg12[%c0_33, %c0_34] : memref<8x8xf32, #tpu.memory_space<vmem>>, vector<8x8xf32>
    %56 = tpu.iota {dimensions = array<i32: 0>} : vector<8x8xi32>
    %57 = tpu.iota {dimensions = array<i32: 1>} : vector<8x8xi32>
    %58 = arith.cmpi sle, %57, %56 : vector<8x8xi32>
    %59 = vector.extract_strided_slice %49 {offsets = [0, 0], sizes = [8, 8], strides = [1, 1]} : vector<8x32xf32> to vector<8x8xf32>
    %60 = vector.extract_strided_slice %59 {offsets = [0, 4], sizes = [8, 4], strides = [1, 1]} : vector<8x8xf32> to vector<8x4xf32>
    %61 = vector.extract_strided_slice %59 {offsets = [0, 0], sizes = [8, 4], strides = [1, 1]} : vector<8x8xf32> to vector<8x4xf32>
    %62 = tpu.concatenate %60, %61 in 1 : vector<8x4xf32>, vector<8x4xf32> -> vector<8x8xf32>
    %63 = arith.mulf %59, %54 : vector<8x8xf32>
    %64 = arith.mulf %62, %55 : vector<8x8xf32>
    %65 = arith.addf %63, %64 : vector<8x8xf32>
    %66 = vector.extract_strided_slice %51 {offsets = [0, 0], sizes = [8, 8], strides = [1, 1]} : vector<8x32xf32> to vector<8x8xf32>
    %67 = vector.extract_strided_slice %66 {offsets = [0, 4], sizes = [8, 4], strides = [1, 1]} : vector<8x8xf32> to vector<8x4xf32>
    %68 = vector.extract_strided_slice %66 {offsets = [0, 0], sizes = [8, 4], strides = [1, 1]} : vector<8x8xf32> to vector<8x4xf32>
    %69 = tpu.concatenate %67, %68 in 1 : vector<8x4xf32>, vector<8x4xf32> -> vector<8x8xf32>
    %70 = arith.mulf %66, %54 : vector<8x8xf32>
    %71 = arith.mulf %69, %55 : vector<8x8xf32>
    %72 = arith.addf %70, %71 : vector<8x8xf32>
    %73 = vector.extract_strided_slice %53 {offsets = [0, 0], sizes = [8, 8], strides = [1, 1]} : vector<8x32xf32> to vector<8x8xf32>
    %74 = arith.truncf %65 : vector<8x8xf32> to vector<8x8xbf16>
    %75 = arith.truncf %72 : vector<8x8xf32> to vector<8x8xbf16>
    %cst_35 = arith.constant dense<0.000000e+00> : vector<8x8xf32>
    %76 = tpu.matmul %74, %75, %cst_35 {dimension_numbers = #tpu.dot_dimension_numbers<[1], [1], [0], [0], [0, 0, 1, 0], [], []>} : vector<8x8xbf16>, vector<8x8xbf16>, vector<8x8xf32> -> vector<8x8xf32>
    %cst_36 = arith.constant 0.353553385 : f32
    %77 = vector.broadcast %cst_36 : f32 to vector<8x8xf32>
    %78 = arith.mulf %76, %77 : vector<8x8xf32>
    %cst_37 = arith.constant -1.000000e+30 : f32
    %79 = vector.broadcast %cst_37 : f32 to vector<8x8xf32>
    %80 = arith.select %58, %78, %79 : vector<8x8xi1>, vector<8x8xf32>
    %cst_38 = arith.constant dense<0xFF800000> : vector<8xf32>
    %81 = vector.multi_reduction <maximumf>, %80, %cst_38 [1] : vector<8x8xf32> to vector<8xf32>
    %82 = vector.shape_cast %81 : vector<8xf32> to vector<8x1xf32>
    %83 = vector.broadcast %82 : vector<8x1xf32> to vector<8x8xf32>
    %84 = arith.subf %80, %83 : vector<8x8xf32>
    %85 = math.exp %84 : vector<8x8xf32>
    %cst_39 = arith.constant dense<0.000000e+00> : vector<8xf32>
    %86 = vector.multi_reduction <add>, %85, %cst_39 [1] : vector<8x8xf32> to vector<8xf32>
    %87 = vector.shape_cast %86 : vector<8xf32> to vector<8x1xf32>
    %88 = tpu.reciprocal %87 {approx = true} : vector<8x1xf32> -> vector<8x1xf32>
    %89 = vector.broadcast %88 : vector<8x1xf32> to vector<8x8xf32>
    %90 = arith.mulf %85, %89 : vector<8x8xf32>
    %91 = arith.truncf %90 : vector<8x8xf32> to vector<8x8xbf16>
    %92 = arith.truncf %73 : vector<8x8xf32> to vector<8x8xbf16>
    %cst_40 = arith.constant dense<0.000000e+00> : vector<8x8xf32>
    %93 = tpu.matmul %91, %92, %cst_40 {dimension_numbers = #tpu.dot_dimension_numbers<[1], [0], [0], [1], [0, 0, 1, 1], [], []>} : vector<8x8xbf16>, vector<8x8xbf16>, vector<8x8xf32> -> vector<8x8xf32>
    %94 = vector.extract_strided_slice %49 {offsets = [0, 8], sizes = [8, 8], strides = [1, 1]} : vector<8x32xf32> to vector<8x8xf32>
    %95 = vector.extract_strided_slice %94 {offsets = [0, 4], sizes = [8, 4], strides = [1, 1]} : vector<8x8xf32> to vector<8x4xf32>
    %96 = vector.extract_strided_slice %94 {offsets = [0, 0], sizes = [8, 4], strides = [1, 1]} : vector<8x8xf32> to vector<8x4xf32>
    %97 = tpu.concatenate %95, %96 in 1 : vector<8x4xf32>, vector<8x4xf32> -> vector<8x8xf32>
    %98 = arith.mulf %94, %54 : vector<8x8xf32>
    %99 = arith.mulf %97, %55 : vector<8x8xf32>
    %100 = arith.addf %98, %99 : vector<8x8xf32>
    %101 = vector.extract_strided_slice %51 {offsets = [0, 8], sizes = [8, 8], strides = [1, 1]} : vector<8x32xf32> to vector<8x8xf32>
    %102 = vector.extract_strided_slice %101 {offsets = [0, 4], sizes = [8, 4], strides = [1, 1]} : vector<8x8xf32> to vector<8x4xf32>
    %103 = vector.extract_strided_slice %101 {offsets = [0, 0], sizes = [8, 4], strides = [1, 1]} : vector<8x8xf32> to vector<8x4xf32>
    %104 = tpu.concatenate %102, %103 in 1 : vector<8x4xf32>, vector<8x4xf32> -> vector<8x8xf32>
    %105 = arith.mulf %101, %54 : vector<8x8xf32>
    %106 = arith.mulf %104, %55 : vector<8x8xf32>
    %107 = arith.addf %105, %106 : vector<8x8xf32>
    %108 = vector.extract_strided_slice %53 {offsets = [0, 8], sizes = [8, 8], strides = [1, 1]} : vector<8x32xf32> to vector<8x8xf32>
    %109 = arith.truncf %100 : vector<8x8xf32> to vector<8x8xbf16>
    %110 = arith.truncf %107 : vector<8x8xf32> to vector<8x8xbf16>
    %cst_41 = arith.constant dense<0.000000e+00> : vector<8x8xf32>
    %111 = tpu.matmul %109, %110, %cst_41 {dimension_numbers = #tpu.dot_dimension_numbers<[1], [1], [0], [0], [0, 0, 1, 0], [], []>} : vector<8x8xbf16>, vector<8x8xbf16>, vector<8x8xf32> -> vector<8x8xf32>
    %cst_42 = arith.constant 0.353553385 : f32
    %112 = vector.broadcast %cst_42 : f32 to vector<8x8xf32>
    %113 = arith.mulf %111, %112 : vector<8x8xf32>
    %cst_43 = arith.constant -1.000000e+30 : f32
    %114 = vector.broadcast %cst_43 : f32 to vector<8x8xf32>
    %115 = arith.select %58, %113, %114 : vector<8x8xi1>, vector<8x8xf32>
    %cst_44 = arith.constant dense<0xFF800000> : vector<8xf32>
    %116 = vector.multi_reduction <maximumf>, %115, %cst_44 [1] : vector<8x8xf32> to vector<8xf32>
    %117 = vector.shape_cast %116 : vector<8xf32> to vector<8x1xf32>
    %118 = vector.broadcast %117 : vector<8x1xf32> to vector<8x8xf32>
    %119 = arith.subf %115, %118 : vector<8x8xf32>
    %120 = math.exp %119 : vector<8x8xf32>
    %cst_45 = arith.constant dense<0.000000e+00> : vector<8xf32>
    %121 = vector.multi_reduction <add>, %120, %cst_45 [1] : vector<8x8xf32> to vector<8xf32>
    %122 = vector.shape_cast %121 : vector<8xf32> to vector<8x1xf32>
    %123 = tpu.reciprocal %122 {approx = true} : vector<8x1xf32> -> vector<8x1xf32>
    %124 = vector.broadcast %123 : vector<8x1xf32> to vector<8x8xf32>
    %125 = arith.mulf %120, %124 : vector<8x8xf32>
    %126 = arith.truncf %125 : vector<8x8xf32> to vector<8x8xbf16>
    %127 = arith.truncf %108 : vector<8x8xf32> to vector<8x8xbf16>
    %cst_46 = arith.constant dense<0.000000e+00> : vector<8x8xf32>
    %128 = tpu.matmul %126, %127, %cst_46 {dimension_numbers = #tpu.dot_dimension_numbers<[1], [0], [0], [1], [0, 0, 1, 1], [], []>} : vector<8x8xbf16>, vector<8x8xbf16>, vector<8x8xf32> -> vector<8x8xf32>
    %129 = vector.extract_strided_slice %49 {offsets = [0, 16], sizes = [8, 8], strides = [1, 1]} : vector<8x32xf32> to vector<8x8xf32>
    %130 = vector.extract_strided_slice %129 {offsets = [0, 4], sizes = [8, 4], strides = [1, 1]} : vector<8x8xf32> to vector<8x4xf32>
    %131 = vector.extract_strided_slice %129 {offsets = [0, 0], sizes = [8, 4], strides = [1, 1]} : vector<8x8xf32> to vector<8x4xf32>
    %132 = tpu.concatenate %130, %131 in 1 : vector<8x4xf32>, vector<8x4xf32> -> vector<8x8xf32>
    %133 = arith.mulf %129, %54 : vector<8x8xf32>
    %134 = arith.mulf %132, %55 : vector<8x8xf32>
    %135 = arith.addf %133, %134 : vector<8x8xf32>
    %136 = vector.extract_strided_slice %51 {offsets = [0, 16], sizes = [8, 8], strides = [1, 1]} : vector<8x32xf32> to vector<8x8xf32>
    %137 = vector.extract_strided_slice %136 {offsets = [0, 4], sizes = [8, 4], strides = [1, 1]} : vector<8x8xf32> to vector<8x4xf32>
    %138 = vector.extract_strided_slice %136 {offsets = [0, 0], sizes = [8, 4], strides = [1, 1]} : vector<8x8xf32> to vector<8x4xf32>
    %139 = tpu.concatenate %137, %138 in 1 : vector<8x4xf32>, vector<8x4xf32> -> vector<8x8xf32>
    %140 = arith.mulf %136, %54 : vector<8x8xf32>
    %141 = arith.mulf %139, %55 : vector<8x8xf32>
    %142 = arith.addf %140, %141 : vector<8x8xf32>
    %143 = vector.extract_strided_slice %53 {offsets = [0, 16], sizes = [8, 8], strides = [1, 1]} : vector<8x32xf32> to vector<8x8xf32>
    %144 = arith.truncf %135 : vector<8x8xf32> to vector<8x8xbf16>
    %145 = arith.truncf %142 : vector<8x8xf32> to vector<8x8xbf16>
    %cst_47 = arith.constant dense<0.000000e+00> : vector<8x8xf32>
    %146 = tpu.matmul %144, %145, %cst_47 {dimension_numbers = #tpu.dot_dimension_numbers<[1], [1], [0], [0], [0, 0, 1, 0], [], []>} : vector<8x8xbf16>, vector<8x8xbf16>, vector<8x8xf32> -> vector<8x8xf32>
    %cst_48 = arith.constant 0.353553385 : f32
    %147 = vector.broadcast %cst_48 : f32 to vector<8x8xf32>
    %148 = arith.mulf %146, %147 : vector<8x8xf32>
    %cst_49 = arith.constant -1.000000e+30 : f32
    %149 = vector.broadcast %cst_49 : f32 to vector<8x8xf32>
    %150 = arith.select %58, %148, %149 : vector<8x8xi1>, vector<8x8xf32>
    %cst_50 = arith.constant dense<0xFF800000> : vector<8xf32>
    %151 = vector.multi_reduction <maximumf>, %150, %cst_50 [1] : vector<8x8xf32> to vector<8xf32>
    %152 = vector.shape_cast %151 : vector<8xf32> to vector<8x1xf32>
    %153 = vector.broadcast %152 : vector<8x1xf32> to vector<8x8xf32>
    %154 = arith.subf %150, %153 : vector<8x8xf32>
    %155 = math.exp %154 : vector<8x8xf32>
    %cst_51 = arith.constant dense<0.000000e+00> : vector<8xf32>
    %156 = vector.multi_reduction <add>, %155, %cst_51 [1] : vector<8x8xf32> to vector<8xf32>
    %157 = vector.shape_cast %156 : vector<8xf32> to vector<8x1xf32>
    %158 = tpu.reciprocal %157 {approx = true} : vector<8x1xf32> -> vector<8x1xf32>
    %159 = vector.broadcast %158 : vector<8x1xf32> to vector<8x8xf32>
    %160 = arith.mulf %155, %159 : vector<8x8xf32>
    %161 = arith.truncf %160 : vector<8x8xf32> to vector<8x8xbf16>
    %162 = arith.truncf %143 : vector<8x8xf32> to vector<8x8xbf16>
    %cst_52 = arith.constant dense<0.000000e+00> : vector<8x8xf32>
    %163 = tpu.matmul %161, %162, %cst_52 {dimension_numbers = #tpu.dot_dimension_numbers<[1], [0], [0], [1], [0, 0, 1, 1], [], []>} : vector<8x8xbf16>, vector<8x8xbf16>, vector<8x8xf32> -> vector<8x8xf32>
    %164 = vector.extract_strided_slice %49 {offsets = [0, 24], sizes = [8, 8], strides = [1, 1]} : vector<8x32xf32> to vector<8x8xf32>
    %165 = vector.extract_strided_slice %164 {offsets = [0, 4], sizes = [8, 4], strides = [1, 1]} : vector<8x8xf32> to vector<8x4xf32>
    %166 = vector.extract_strided_slice %164 {offsets = [0, 0], sizes = [8, 4], strides = [1, 1]} : vector<8x8xf32> to vector<8x4xf32>
    %167 = tpu.concatenate %165, %166 in 1 : vector<8x4xf32>, vector<8x4xf32> -> vector<8x8xf32>
    %168 = arith.mulf %164, %54 : vector<8x8xf32>
    %169 = arith.mulf %167, %55 : vector<8x8xf32>
    %170 = arith.addf %168, %169 : vector<8x8xf32>
    %171 = vector.extract_strided_slice %51 {offsets = [0, 24], sizes = [8, 8], strides = [1, 1]} : vector<8x32xf32> to vector<8x8xf32>
    %172 = vector.extract_strided_slice %171 {offsets = [0, 4], sizes = [8, 4], strides = [1, 1]} : vector<8x8xf32> to vector<8x4xf32>
    %173 = vector.extract_strided_slice %171 {offsets = [0, 0], sizes = [8, 4], strides = [1, 1]} : vector<8x8xf32> to vector<8x4xf32>
    %174 = tpu.concatenate %172, %173 in 1 : vector<8x4xf32>, vector<8x4xf32> -> vector<8x8xf32>
    %175 = arith.mulf %171, %54 : vector<8x8xf32>
    %176 = arith.mulf %174, %55 : vector<8x8xf32>
    %177 = arith.addf %175, %176 : vector<8x8xf32>
    %178 = vector.extract_strided_slice %53 {offsets = [0, 24], sizes = [8, 8], strides = [1, 1]} : vector<8x32xf32> to vector<8x8xf32>
    %179 = arith.truncf %170 : vector<8x8xf32> to vector<8x8xbf16>
    %180 = arith.truncf %177 : vector<8x8xf32> to vector<8x8xbf16>
    %cst_53 = arith.constant dense<0.000000e+00> : vector<8x8xf32>
    %181 = tpu.matmul %179, %180, %cst_53 {dimension_numbers = #tpu.dot_dimension_numbers<[1], [1], [0], [0], [0, 0, 1, 0], [], []>} : vector<8x8xbf16>, vector<8x8xbf16>, vector<8x8xf32> -> vector<8x8xf32>
    %cst_54 = arith.constant 0.353553385 : f32
    %182 = vector.broadcast %cst_54 : f32 to vector<8x8xf32>
    %183 = arith.mulf %181, %182 : vector<8x8xf32>
    %cst_55 = arith.constant -1.000000e+30 : f32
    %184 = vector.broadcast %cst_55 : f32 to vector<8x8xf32>
    %185 = arith.select %58, %183, %184 : vector<8x8xi1>, vector<8x8xf32>
    %cst_56 = arith.constant dense<0xFF800000> : vector<8xf32>
    %186 = vector.multi_reduction <maximumf>, %185, %cst_56 [1] : vector<8x8xf32> to vector<8xf32>
    %187 = vector.shape_cast %186 : vector<8xf32> to vector<8x1xf32>
    %188 = vector.broadcast %187 : vector<8x1xf32> to vector<8x8xf32>
    %189 = arith.subf %185, %188 : vector<8x8xf32>
    %190 = math.exp %189 : vector<8x8xf32>
    %cst_57 = arith.constant dense<0.000000e+00> : vector<8xf32>
    %191 = vector.multi_reduction <add>, %190, %cst_57 [1] : vector<8x8xf32> to vector<8xf32>
    %192 = vector.shape_cast %191 : vector<8xf32> to vector<8x1xf32>
    %193 = tpu.reciprocal %192 {approx = true} : vector<8x1xf32> -> vector<8x1xf32>
    %194 = vector.broadcast %193 : vector<8x1xf32> to vector<8x8xf32>
    %195 = arith.mulf %190, %194 : vector<8x8xf32>
    %196 = arith.truncf %195 : vector<8x8xf32> to vector<8x8xbf16>
    %197 = arith.truncf %178 : vector<8x8xf32> to vector<8x8xbf16>
    %cst_58 = arith.constant dense<0.000000e+00> : vector<8x8xf32>
    %198 = tpu.matmul %196, %197, %cst_58 {dimension_numbers = #tpu.dot_dimension_numbers<[1], [0], [0], [1], [0, 0, 1, 1], [], []>} : vector<8x8xbf16>, vector<8x8xbf16>, vector<8x8xf32> -> vector<8x8xf32>
    %199 = tpu.concatenate %93, %128, %163, %198 in 1 : vector<8x8xf32>, vector<8x8xf32>, vector<8x8xf32>, vector<8x8xf32> -> vector<8x32xf32>
    %200 = arith.truncf %199 : vector<8x32xf32> to vector<8x32xbf16>
    %c0_59 = arith.constant 0 : index
    %c0_60 = arith.constant 0 : index
    %201 = vector.load %arg10[%c0_59, %c0_60] : memref<32x32xbf16, #tpu.memory_space<vmem>>, vector<32x32xbf16>
    %cst_61 = arith.constant dense<0.000000e+00> : vector<8x32xf32>
    %202 = tpu.matmul %200, %201, %cst_61 {dimension_numbers = #tpu.dot_dimension_numbers<[1], [0], [0], [1], [0, 0, 1, 1], [], []>} : vector<8x32xbf16>, vector<32x32xbf16>, vector<8x32xf32> -> vector<8x32xf32>
    %203 = vector.shape_cast %202 : vector<8x32xf32> to vector<1x8x32xf32>
    %c0_62 = arith.constant 0 : index
    %c0_63 = arith.constant 0 : index
    %c0_64 = arith.constant 0 : index
    %204 = vector.load %arg13[%c0_62, %c0_63, %c0_64] : memref<1x8x32xf32, #tpu.memory_space<vmem>>, vector<1x8x32xf32>
    tpu.vector_store %arg13[%c0_62, %c0_63, %c0_64], %203 {strides = array<i32>} : memref<1x8x32xf32, #tpu.memory_space<vmem>>, vector<1x8x32xf32>,
    return
  }
  func.func @transform_0(%arg0: i32) -> (i32, i32, i32) {
    %c0_i32 = arith.constant 0 : i32
    %c0_i32_0 = arith.constant 0 : i32
    %c0_i32_1 = arith.constant 0 : i32
    return %arg0, %c0_i32, %c0_i32_0 : i32, i32, i32
  }
  func.func @transform_1(%arg0: i32) -> (i32, i32, i32) {
    %c0_i32 = arith.constant 0 : i32
    %c0_i32_0 = arith.constant 0 : i32
    %c0_i32_1 = arith.constant 0 : i32
    return %arg0, %c0_i32, %c0_i32_0 : i32, i32, i32
  }
  func.func @transform_2(%arg0: i32) -> (i32, i32, i32) {
    %c0_i32 = arith.constant 0 : i32
    %c0_i32_0 = arith.constant 0 : i32
    %c0_i32_1 = arith.constant 0 : i32
    return %arg0, %c0_i32, %c0_i32_0 : i32, i32, i32
  }
  func.func @transform_3(%arg0: i32) -> (i32, i32) {
    %c0_i32 = arith.constant 0 : i32
    %c0_i32_0 = arith.constant 0 : i32
    %c0_i32_1 = arith.constant 0 : i32
    return %c0_i32, %c0_i32_0 : i32, i32
  }
  func.func @transform_4(%arg0: i32) -> (i32, i32) {
    %c0_i32 = arith.constant 0 : i32
    %c0_i32_0 = arith.constant 0 : i32
    %c0_i32_1 = arith.constant 0 : i32
    return %c0_i32, %c0_i32_0 : i32, i32
  }
  func.func @transform_5(%arg0: i32) -> (i32, i32) {
    %c0_i32 = arith.constant 0 : i32
    %c0_i32_0 = arith.constant 0 : i32
    %c0_i32_1 = arith.constant 0 : i32
    return %c0_i32, %c0_i32_0 : i32, i32
  }
  func.func @transform_6(%arg0: i32) -> (i32, i32) {
    %c0_i32 = arith.constant 0 : i32
    %c0_i32_0 = arith.constant 0 : i32
    %c0_i32_1 = arith.constant 0 : i32
    return %c0_i32, %c0_i32_0 : i32, i32
  }
  func.func @transform_7(%arg0: i32) -> (i32, i32) {
    %c0_i32 = arith.constant 0 : i32
    %c0_i32_0 = arith.constant 0 : i32
    %c0_i32_1 = arith.constant 0 : i32
    return %c0_i32, %c0_i32_0 : i32, i32
  }
  func.func @transform_8(%arg0: i32) -> (i32, i32) {
    %c0_i32 = arith.constant 0 : i32
    %c0_i32_0 = arith.constant 0 : i32
    %c0_i32_1 = arith.constant 0 : i32
    return %c0_i32, %c0_i32_0 : i32, i32
  }
  func.func @transform_9(%arg0: i32) -> (i32, i32) {
    %c0_i32 = arith.constant 0 : i32
    %c0_i32_0 = arith.constant 0 : i32
    %c0_i32_1 = arith.constant 0 : i32
    return %c0_i32, %c0_i32_0 : i32, i32
  }
  func.func @transform_10(%arg0: i32) -> (i32, i32) {
    %c0_i32 = arith.constant 0 : i32
    %c0_i32_0 = arith.constant 0 : i32
    %c0_i32_1 = arith.constant 0 : i32
    return %c0_i32, %c0_i32_0 : i32, i32
  }
  func.func @transform_11(%arg0: i32) -> (i32, i32) {
    %c0_i32 = arith.constant 0 : i32
    %c0_i32_0 = arith.constant 0 : i32
    %c0_i32_1 = arith.constant 0 : i32
    return %c0_i32, %c0_i32_0 : i32, i32
  }
  func.func @transform_12(%arg0: i32) -> (i32, i32, i32) {
    %c0_i32 = arith.constant 0 : i32
    %c0_i32_0 = arith.constant 0 : i32
    %c0_i32_1 = arith.constant 0 : i32
    return %arg0, %c0_i32, %c0_i32_0 : i32, i32, i32
  }
}

</mosaic_0001>

<llo_original>
// kernel: tpu_custom_call.1
$region0: #{tpu_custom_call.1}
  #allocation0 [shape = 'u32[]', space=smem, size = 0x4, offset = 0x4, fixed_abs, tag = 'smem constant byte address 0x4 - core index']
  #allocation1 [shape = 'u32[144,128]{1,0:T(1,128)}', space=vmem, size = 0x12000, scoped, tag = 'internal scratch']
  %s0 = inlined_call_operand.hbm [shape: f32[2,8,32], index: 0, kind: input, shape index: {}]
  %s1 = inlined_call_operand.hbm [shape: f32[2,8,32], index: 1, kind: input, shape index: {}]
  %s2 = inlined_call_operand.hbm [shape: f32[2,8,32], index: 2, kind: input, shape index: {}]
  %s3 = inlined_call_operand.vmem [shape: f32[1,32], index: 3, kind: input, shape index: {}]
  %s4 = inlined_call_operand.hbm [shape: f32[1,32], index: 4, kind: input, shape index: {}]
  %s5 = inlined_call_operand.hbm [shape: f32[1,32], index: 5, kind: input, shape index: {}]
  %s6 = inlined_call_operand.vmem [shape: bf16[32,32], index: 6, kind: input, shape index: {}]
  %s7 = inlined_call_operand.hbm [shape: bf16[32,32], index: 7, kind: input, shape index: {}]
  %s8 = inlined_call_operand.hbm [shape: bf16[32,32], index: 8, kind: input, shape index: {}]
  %s9 = inlined_call_operand.vmem [shape: bf16[32,32], index: 9, kind: input, shape index: {}]
  %s10 = inlined_call_operand.hbm [shape: f32[8,8], index: 10, kind: input, shape index: {}]
  %s11 = inlined_call_operand.vmem [shape: f32[8,8], index: 11, kind: input, shape index: {}]
  %s12 = inlined_call_operand.hbm [shape: f32[2,8,32], index: 12, kind: output, shape index: {}]
  %s13 = sld [smem:[#allocation0]]
  $region113: #{tpu_custom_call.1} parent=0
    _
  %s15 = ssub.s32 1, %s13
  %s16 = scalar_select 0, %s15, %s13
  $region1: #{tpu_custom_call.1} parent=0
    #allocation2 [shape = 'u8[8192]{0}', space=vmem, size = 0x2000, scoped, tag = 'input window, operand 0']
    #allocation3 [shape = 's32[2]{0}', space=sflag, size = 0x8, scoped, tag = 'scoped memory for tpu_custom_call.1']
    #allocation4 [shape = 's32[2]{0}', space=sflag, size = 0x8, scoped, tag = 'scoped memory for tpu_custom_call.1']
    #allocation5 [shape = 'u8[8192]{0}', space=vmem, size = 0x2000, scoped, tag = 'input window, operand 1']
    #allocation6 [shape = 's32[2]{0}', space=sflag, size = 0x8, scoped, tag = 'scoped memory for tpu_custom_call.1']
    #allocation7 [shape = 'u8[8192]{0}', space=vmem, size = 0x2000, scoped, tag = 'input window, operand 2']
    #allocation8 [shape = 'u8[512]{0}', space=vmem, size = 0x400, scoped, tag = 'input window, operand 4, single buffered']
    #allocation9 [shape = 's32[1]{0}', space=sflag, size = 0x4, scoped, tag = 'scoped memory for tpu_custom_call.1']
    #allocation10 [shape = 'u8[512]{0}', space=vmem, size = 0x400, scoped, tag = 'input window, operand 5, single buffered']
    #allocation11 [shape = 'u8[8192]{0}', space=vmem, size = 0x2000, scoped, tag = 'input window, operand 7, single buffered']
    #allocation12 [shape = 's32[1]{0}', space=sflag, size = 0x4, scoped, tag = 'scoped memory for tpu_custom_call.1']
    #allocation13 [shape = 'u8[8192]{0}', space=vmem, size = 0x2000, scoped, tag = 'input window, operand 8, single buffered']
    #allocation14 [shape = 'u8[4096]{0}', space=vmem, size = 0x1000, scoped, tag = 'input window, operand 10, single buffered']
    #allocation15 [shape = 's32[1]{0}', space=sflag, size = 0x4, scoped, tag = 'scoped memory for tpu_custom_call.1']
    #allocation16 [shape = 'u8[8192]{0}', space=vmem, size = 0x2000, scoped, tag = 'output window, operand 0']
    %17 = vsyncpa [#allocation3], 0
    %s18 = scalar_lea.sflag [#allocation3], 1
    %19 = vsyncpa %s18, 0
    %20 = vsyncpa [#allocation6], 0
    %s21 = scalar_lea.sflag [#allocation6], 1
    %22 = vsyncpa %s21, 0
    %23 = vsyncpa [#allocation9], 0
    %24 = vsyncpa [#allocation12], 0
    %25 = vsyncpa [#allocation15], 0
    %26 = vsyncpa [#allocation4], 0
    %s27 = scalar_lea.sflag [#allocation4], 1
    %28 = vsyncpa %s27, 0
    loop: start=0, step=1, limit=4
    $region2: #{tpu_custom_call.1} parent=1 // loop_pre_header
      _
    $region3: #{tpu_custom_call.1} parent=1 // loop_header
      %s30 = sphi 0, %s34
      %p31 = scmp.ge.s32.totalorder %s30, 4
      %s40 = sphi 0, %s42
      %s43 = sphi 0, %s40
      %s44 = sphi 0, %s43
      %s60 = sphi 0, %s44
      %s66 = sphi 0, %s68
      %s69 = sphi 0, %s66
      %s70 = sphi 0, %s69
      %s86 = sphi 0, %s70
      %s92 = sphi 0, %s94
      %s95 = sphi 0, %s92
      %s96 = sphi 0, %s95
      %s112 = sphi 0, %s96
      %s116 = sphi 0, %s116
      %s118 = sphi 0, %s116
      %s119 = sphi 0, %s118
      %s133 = sphi 0, %s119
      %s137 = sphi 0, %s137
      %s139 = sphi 0, %s137
      %s140 = sphi 0, %s139
      %s154 = sphi 0, %s140
      %s158 = sphi 0, %s158
      %s160 = sphi 0, %s158
      %s161 = sphi 0, %s160
      %s175 = sphi 0, %s161
      %s179 = sphi 0, %s179
      %s181 = sphi 0, %s179
      %s182 = sphi 0, %s181
      %s196 = sphi 0, %s182
      %s200 = sphi 0, %s200
      %s202 = sphi 0, %s200
      %s203 = sphi 0, %s202
      %s217 = sphi 0, %s203
      %s221 = sphi 0, %s221
      %s223 = sphi 0, %s221
      %s224 = sphi 0, %s223
      %s238 = sphi 0, %s224
      %s242 = sphi 0, %s242
      %s244 = sphi 0, %s242
      %s245 = sphi 0, %s244
      %s259 = sphi 0, %s245
      %s263 = sphi 0, %s263
      %s265 = sphi 0, %s263
      %s266 = sphi 0, %s265
      %s280 = sphi 0, %s266
      %s284 = sphi 0, %s284
      %s286 = sphi 0, %s284
      %s287 = sphi 0, %s286
      %s301 = sphi 0, %s287
      %s307 = sphi 0, %s309
      %s310 = sphi 0, %s307
      %s311 = sphi 0, %s310
      %s327 = sphi 0, %s311
    $region4: #{tpu_custom_call.1} parent=1 // loop_header_branch
      %33 = sbr.rel (%p31) target = $region8
    $region5: #{tpu_custom_call.1} parent=1 // loop_body
      %s35 = ssub.s32 %s30, 1
      %s36 = ssub.s32 %s30, 2
      %s37 = sadd.s32 %s30, 1
      %s38 = ssub.s32 %s30, %s37
      %p39 = scmp.eq.s32.totalorder %s38, 0
      %s41 = sadd.s32 %s40, 1
      %s42 = scalar_select %p39, %s40, %s41
      %p45 = pneg %p39
      %p46 = scmp.eq.s32.totalorder %s30, 1
      %p47 = por %p45, %p46
      %p48 = scmp.ne.s32.totalorder %s40, %s43
      %p49 = scmp.eq.s32.totalorder %s30, 0
      %p50 = por %p48, %p49
      %p51 = scmp.ne.s32.totalorder %s40, %s43
      %p52 = scmp.eq.s32.totalorder %s35, 1
      %p53 = por %p51, %p52
      %p54 = scmp.ne.s32.totalorder %s43, %s44
      %p55 = scmp.eq.s32.totalorder %s35, 0
      %p56 = por %p54, %p55
      %p57 = scmp.ne.s32.totalorder %s43, %s44
      %p58 = scmp.eq.s32.totalorder %s36, 1
      %p59 = por %p57, %p58
      %p61 = scmp.ne.s32.totalorder %s44, %s60
      %p62 = scmp.eq.s32.totalorder %s36, 0
      %p63 = por %p61, %p62
      %s64 = ssub.s32 %s30, %s37
      %p65 = scmp.eq.s32.totalorder %s64, 0
      %s67 = sadd.s32 %s66, 1
      %s68 = scalar_select %p65, %s66, %s67
      %p71 = pneg %p65
      %p72 = scmp.eq.s32.totalorder %s30, 1
      %p73 = por %p71, %p72
      %p74 = scmp.ne.s32.totalorder %s66, %s69
      %p75 = scmp.eq.s32.totalorder %s30, 0
      %p76 = por %p74, %p75
      %p77 = scmp.ne.s32.totalorder %s66, %s69
      %p78 = scmp.eq.s32.totalorder %s35, 1
      %p79 = por %p77, %p78
      %p80 = scmp.ne.s32.totalorder %s69, %s70
      %p81 = scmp.eq.s32.totalorder %s35, 0
      %p82 = por %p80, %p81
      %p83 = scmp.ne.s32.totalorder %s69, %s70
      %p84 = scmp.eq.s32.totalorder %s36, 1
      %p85 = por %p83, %p84
      %p87 = scmp.ne.s32.totalorder %s70, %s86
      %p88 = scmp.eq.s32.totalorder %s36, 0
      %p89 = por %p87, %p88
      %s90 = ssub.s32 %s30, %s37
      %p91 = scmp.eq.s32.totalorder %s90, 0
      %s93 = sadd.s32 %s92, 1
      %s94 = scalar_select %p91, %s92, %s93
      %p97 = pneg %p91
      %p98 = scmp.eq.s32.totalorder %s30, 1
      %p99 = por %p97, %p98
      %p100 = scmp.ne.s32.totalorder %s92, %s95
      %p101 = scmp.eq.s32.totalorder %s30, 0
      %p102 = por %p100, %p101
      %p103 = scmp.ne.s32.totalorder %s92, %s95
      %p104 = scmp.eq.s32.totalorder %s35, 1
      %p105 = por %p103, %p104
      %p106 = scmp.ne.s32.totalorder %s95, %s96
      %p107 = scmp.eq.s32.totalorder %s35, 0
      %p108 = por %p106, %p107
      %p109 = scmp.ne.s32.totalorder %s95, %s96
      %p110 = scmp.eq.s32.totalorder %s36, 1
      %p111 = por %p109, %p110
      %p113 = scmp.ne.s32.totalorder %s96, %s112
      %p114 = scmp.eq.s32.totalorder %s36, 0
      %p115 = por %p113, %p114
      %s117 = sadd.s32 %s116, 1
      %p120 = scmp.eq.s32.totalorder %s30, 1
      %p121 = scmp.ne.s32.totalorder %s116, %s118
      %p122 = scmp.eq.s32.totalorder %s30, 0
      %p123 = por %p121, %p122
      %p124 = scmp.ne.s32.totalorder %s116, %s118
      %p125 = scmp.eq.s32.totalorder %s35, 1
      %p126 = por %p124, %p125
      %p127 = scmp.ne.s32.totalorder %s118, %s119
      %p128 = scmp.eq.s32.totalorder %s35, 0
      %p129 = por %p127, %p128
      %p130 = scmp.ne.s32.totalorder %s118, %s119
      %p131 = scmp.eq.s32.totalorder %s36, 1
      %p132 = por %p130, %p131
      %p134 = scmp.ne.s32.totalorder %s119, %s133
      %p135 = scmp.eq.s32.totalorder %s36, 0
      %p136 = por %p134, %p135
      %s138 = sadd.s32 %s137, 1
      %p141 = scmp.eq.s32.totalorder %s30, 1
      %p142 = scmp.ne.s32.totalorder %s137, %s139
      %p143 = scmp.eq.s32.totalorder %s30, 0
      %p144 = por %p142, %p143
      %p145 = scmp.ne.s32.totalorder %s137, %s139
      %p146 = scmp.eq.s32.totalorder %s35, 1
      %p147 = por %p145, %p146
      %p148 = scmp.ne.s32.totalorder %s139, %s140
      %p149 = scmp.eq.s32.totalorder %s35, 0
      %p150 = por %p148, %p149
      %p151 = scmp.ne.s32.totalorder %s139, %s140
      %p152 = scmp.eq.s32.totalorder %s36, 1
      %p153 = por %p151, %p152
      %p155 = scmp.ne.s32.totalorder %s140, %s154
      %p156 = scmp.eq.s32.totalorder %s36, 0
      %p157 = por %p155, %p156
      %s159 = sadd.s32 %s158, 1
      %p162 = scmp.eq.s32.totalorder %s30, 1
      %p163 = scmp.ne.s32.totalorder %s158, %s160
      %p164 = scmp.eq.s32.totalorder %s30, 0
      %p165 = por %p163, %p164
      %p166 = scmp.ne.s32.totalorder %s158, %s160
      %p167 = scmp.eq.s32.totalorder %s35, 1
      %p168 = por %p166, %p167
      %p169 = scmp.ne.s32.totalorder %s160, %s161
      %p170 = scmp.eq.s32.totalorder %s35, 0
      %p171 = por %p169, %p170
      %p172 = scmp.ne.s32.totalorder %s160, %s161
      %p173 = scmp.eq.s32.totalorder %s36, 1
      %p174 = por %p172, %p173
      %p176 = scmp.ne.s32.totalorder %s161, %s175
      %p177 = scmp.eq.s32.totalorder %s36, 0
      %p178 = por %p176, %p177
      %s180 = sadd.s32 %s179, 1
      %p183 = scmp.eq.s32.totalorder %s30, 1
      %p184 = scmp.ne.s32.totalorder %s179, %s181
      %p185 = scmp.eq.s32.totalorder %s30, 0
      %p186 = por %p184, %p185
      %p187 = scmp.ne.s32.totalorder %s179, %s181
      %p188 = scmp.eq.s32.totalorder %s35, 1
      %p189 = por %p187, %p188
      %p190 = scmp.ne.s32.totalorder %s181, %s182
      %p191 = scmp.eq.s32.totalorder %s35, 0
      %p192 = por %p190, %p191
      %p193 = scmp.ne.s32.totalorder %s181, %s182
      %p194 = scmp.eq.s32.totalorder %s36, 1
      %p195 = por %p193, %p194
      %p197 = scmp.ne.s32.totalorder %s182, %s196
      %p198 = scmp.eq.s32.totalorder %s36, 0
      %p199 = por %p197, %p198
      %s201 = sadd.s32 %s200, 1
      %p204 = scmp.eq.s32.totalorder %s30, 1
      %p205 = scmp.ne.s32.totalorder %s200, %s202
      %p206 = scmp.eq.s32.totalorder %s30, 0
      %p207 = por %p205, %p206
      %p208 = scmp.ne.s32.totalorder %s200, %s202
      %p209 = scmp.eq.s32.totalorder %s35, 1
      %p210 = por %p208, %p209
      %p211 = scmp.ne.s32.totalorder %s202, %s203
      %p212 = scmp.eq.s32.totalorder %s35, 0
      %p213 = por %p211, %p212
      %p214 = scmp.ne.s32.totalorder %s202, %s203
      %p215 = scmp.eq.s32.totalorder %s36, 1
      %p216 = por %p214, %p215
      %p218 = scmp.ne.s32.totalorder %s203, %s217
      %p219 = scmp.eq.s32.totalorder %s36, 0
      %p220 = por %p218, %p219
      %s222 = sadd.s32 %s221, 1
      %p225 = scmp.eq.s32.totalorder %s30, 1
      %p226 = scmp.ne.s32.totalorder %s221, %s223
      %p227 = scmp.eq.s32.totalorder %s30, 0
      %p228 = por %p226, %p227
      %p229 = scmp.ne.s32.totalorder %s221, %s223
      %p230 = scmp.eq.s32.totalorder %s35, 1
      %p231 = por %p229, %p230
      %p232 = scmp.ne.s32.totalorder %s223, %s224
      %p233 = scmp.eq.s32.totalorder %s35, 0
      %p234 = por %p232, %p233
      %p235 = scmp.ne.s32.totalorder %s223, %s224
      %p236 = scmp.eq.s32.totalorder %s36, 1
      %p237 = por %p235, %p236
      %p239 = scmp.ne.s32.totalorder %s224, %s238
      %p240 = scmp.eq.s32.totalorder %s36, 0
      %p241 = por %p239, %p240
      %s243 = sadd.s32 %s242, 1
      %p246 = scmp.eq.s32.totalorder %s30, 1
      %p247 = scmp.ne.s32.totalorder %s242, %s244
      %p248 = scmp.eq.s32.totalorder %s30, 0
      %p249 = por %p247, %p248
      %p250 = scmp.ne.s32.totalorder %s242, %s244
      %p251 = scmp.eq.s32.totalorder %s35, 1
      %p252 = por %p250, %p251
      %p253 = scmp.ne.s32.totalorder %s244, %s245
      %p254 = scmp.eq.s32.totalorder %s35, 0
      %p255 = por %p253, %p254
      %p256 = scmp.ne.s32.totalorder %s244, %s245
      %p257 = scmp.eq.s32.totalorder %s36, 1
      %p258 = por %p256, %p257
      %p260 = scmp.ne.s32.totalorder %s245, %s259
      %p261 = scmp.eq.s32.totalorder %s36, 0
      %p262 = por %p260, %p261
      %s264 = sadd.s32 %s263, 1
      %p267 = scmp.eq.s32.totalorder %s30, 1
      %p268 = scmp.ne.s32.totalorder %s263, %s265
      %p269 = scmp.eq.s32.totalorder %s30, 0
      %p270 = por %p268, %p269
      %p271 = scmp.ne.s32.totalorder %s263, %s265
      %p272 = scmp.eq.s32.totalorder %s35, 1
      %p273 = por %p271, %p272
      %p274 = scmp.ne.s32.totalorder %s265, %s266
      %p275 = scmp.eq.s32.totalorder %s35, 0
      %p276 = por %p274, %p275
      %p277 = scmp.ne.s32.totalorder %s265, %s266
      %p278 = scmp.eq.s32.totalorder %s36, 1
      %p279 = por %p277, %p278
      %p281 = scmp.ne.s32.totalorder %s266, %s280
      %p282 = scmp.eq.s32.totalorder %s36, 0
      %p283 = por %p281, %p282
      %s285 = sadd.s32 %s284, 1
      %p288 = scmp.eq.s32.totalorder %s30, 1
      %p289 = scmp.ne.s32.totalorder %s284, %s286
      %p290 = scmp.eq.s32.totalorder %s30, 0
      %p291 = por %p289, %p290
      %p292 = scmp.ne.s32.totalorder %s284, %s286
      %p293 = scmp.eq.s32.totalorder %s35, 1
      %p294 = por %p292, %p293
      %p295 = scmp.ne.s32.totalorder %s286, %s287
      %p296 = scmp.eq.s32.totalorder %s35, 0
      %p297 = por %p295, %p296
      %p298 = scmp.ne.s32.totalorder %s286, %s287
      %p299 = scmp.eq.s32.totalorder %s36, 1
      %p300 = por %p298, %p299
      %p302 = scmp.ne.s32.totalorder %s287, %s301
      %p303 = scmp.eq.s32.totalorder %s36, 0
      %p304 = por %p302, %p303
      %s305 = ssub.s32 %s30, %s37
      %p306 = scmp.eq.s32.totalorder %s305, 0
      %s308 = sadd.s32 %s307, 1
      %s309 = scalar_select %p306, %s307, %s308
      %p312 = pneg %p306
      %p313 = scmp.eq.s32.totalorder %s30, 1
      %p314 = por %p312, %p313
      %p315 = scmp.ne.s32.totalorder %s307, %s310
      %p316 = scmp.eq.s32.totalorder %s30, 0
      %p317 = por %p315, %p316
      %p318 = scmp.ne.s32.totalorder %s307, %s310
      %p319 = scmp.eq.s32.totalorder %s35, 1
      %p320 = por %p318, %p319
      %p321 = scmp.ne.s32.totalorder %s310, %s311
      %p322 = scmp.eq.s32.totalorder %s35, 0
      %p323 = por %p321, %p322
      %p324 = scmp.ne.s32.totalorder %s310, %s311
      %p325 = scmp.eq.s32.totalorder %s36, 1
      %p326 = por %p324, %p325
      %p328 = scmp.ne.s32.totalorder %s311, %s327
      %p329 = scmp.eq.s32.totalorder %s36, 0
      %p330 = por %p328, %p329
      %p331 = scmp.le.s32.totalorder 1, %s30
      %p332 = scmp.lt.s32.totalorder %s30, 3
      %p333 = pnand %p331, %p332
      %p334 = pneg %p333
      // Predicated region
      $region9: #{tpu_custom_call.1} parent=5 // pred_check
        _
      $region10: #{tpu_custom_call.1} parent=5 // pred_check_branch
        %336 = sbr.rel (%p333) target = $region12
      $region11: #{tpu_custom_call.1} parent=5 // pred_region
        %s337 = ssub.s32 %s30, 1
        // Predicated region
        $region13: #{tpu_custom_call.1} parent=11 // pred_check
          %p338 = pneg %p129
        $region14: #{tpu_custom_call.1} parent=11 // pred_check_branch
          %340 = sbr.rel (%p338) target = $region16
        $region15: #{tpu_custom_call.1} parent=11 // pred_region
          _
        $region16: #{tpu_custom_call.1} parent=11 // pred_fallthru
          _
        // Predicated region
        $region17: #{tpu_custom_call.1} parent=11 // pred_check
          %p341 = pneg %p150
        $region18: #{tpu_custom_call.1} parent=11 // pred_check_branch
          %343 = sbr.rel (%p341) target = $region20
        $region19: #{tpu_custom_call.1} parent=11 // pred_region
          %s345 = ssub.s32 16, 16
          %346 = vsyncadd [#allocation9], %s345
          %s348 = sshll.u32 [#allocation8], 4
          %s349 = int_to_ptr.vmem [resolvable:$true] %s348
          %351 = dma.hbm_to_vmem [thread:$0]  %s4, 16, %s349, [#allocation9]
        $region20: #{tpu_custom_call.1} parent=11 // pred_fallthru
          _
        // Predicated region
        $region21: #{tpu_custom_call.1} parent=11 // pred_check
          %p352 = pneg %p171
        $region22: #{tpu_custom_call.1} parent=11 // pred_check_branch
          %354 = sbr.rel (%p352) target = $region24
        $region23: #{tpu_custom_call.1} parent=11 // pred_region
          %s356 = ssub.s32 16, 16
          %357 = vsyncadd [#allocation9], %s356
          %s359 = sshll.u32 [#allocation10], 4
          %s360 = int_to_ptr.vmem [resolvable:$true] %s359
          %362 = dma.hbm_to_vmem [thread:$0]  %s5, 16, %s360, [#allocation9]
        $region24: #{tpu_custom_call.1} parent=11 // pred_fallthru
          _
        // Predicated region
        $region25: #{tpu_custom_call.1} parent=11 // pred_check
          %p363 = pneg %p192
        $region26: #{tpu_custom_call.1} parent=11 // pred_check_branch
          %365 = sbr.rel (%p363) target = $region28
        $region27: #{tpu_custom_call.1} parent=11 // pred_region
          _
        $region28: #{tpu_custom_call.1} parent=11 // pred_fallthru
          _
        // Predicated region
        $region29: #{tpu_custom_call.1} parent=11 // pred_check
          %p366 = pneg %p213
        $region30: #{tpu_custom_call.1} parent=11 // pred_check_branch
          %368 = sbr.rel (%p366) target = $region32
        $region31: #{tpu_custom_call.1} parent=11 // pred_region
          %s370 = ssub.s32 256, 256
          %371 = vsyncadd [#allocation12], %s370
          %s372 = sshll.u32 [#allocation11], 4
          %s373 = int_to_ptr.vmem [resolvable:$true] %s372
          %378 = dma.hbm_to_vmem [thread:$0]  %s7, 256, %s373, [#allocation12], 64, 64, 4
        $region32: #{tpu_custom_call.1} parent=11 // pred_fallthru
          _
        // Predicated region
        $region33: #{tpu_custom_call.1} parent=11 // pred_check
          %p379 = pneg %p234
        $region34: #{tpu_custom_call.1} parent=11 // pred_check_branch
          %381 = sbr.rel (%p379) target = $region36
        $region35: #{tpu_custom_call.1} parent=11 // pred_region
          %s383 = ssub.s32 256, 256
          %384 = vsyncadd [#allocation12], %s383
          %s385 = sshll.u32 [#allocation13], 4
          %s386 = int_to_ptr.vmem [resolvable:$true] %s385
          %391 = dma.hbm_to_vmem [thread:$0]  %s8, 256, %s386, [#allocation12], 64, 64, 4
        $region36: #{tpu_custom_call.1} parent=11 // pred_fallthru
          _
        // Predicated region
        $region37: #{tpu_custom_call.1} parent=11 // pred_check
          %p392 = pneg %p255
        $region38: #{tpu_custom_call.1} parent=11 // pred_check_branch
          %394 = sbr.rel (%p392) target = $region40
        $region39: #{tpu_custom_call.1} parent=11 // pred_region
          _
        $region40: #{tpu_custom_call.1} parent=11 // pred_fallthru
          _
        // Predicated region
        $region41: #{tpu_custom_call.1} parent=11 // pred_check
          %p395 = pneg %p276
        $region42: #{tpu_custom_call.1} parent=11 // pred_check_branch
          %397 = sbr.rel (%p395) target = $region44
        $region43: #{tpu_custom_call.1} parent=11 // pred_region
          %s399 = ssub.s32 128, 128
          %400 = vsyncadd [#allocation15], %s399
          %s402 = sshll.u32 [#allocation14], 4
          %s403 = int_to_ptr.vmem [resolvable:$true] %s402
          %405 = dma.hbm_to_vmem [thread:$0]  %s10, 128, %s403, [#allocation15]
        $region44: #{tpu_custom_call.1} parent=11 // pred_fallthru
          _
        // Predicated region
        $region45: #{tpu_custom_call.1} parent=11 // pred_check
          %p406 = pneg %p297
        $region46: #{tpu_custom_call.1} parent=11 // pred_check_branch
          %408 = sbr.rel (%p406) target = $region48
        $region47: #{tpu_custom_call.1} parent=11 // pred_region
          _
        $region48: #{tpu_custom_call.1} parent=11 // pred_fallthru
          _
      $region12: #{tpu_custom_call.1} parent=5 // pred_fallthru
        _
      %p409 = scmp.lt.s32.totalorder %s30, 2
      // Predicated region
      $region49: #{tpu_custom_call.1} parent=5 // pred_check
        %p410 = pneg %p409
      $region50: #{tpu_custom_call.1} parent=5 // pred_check_branch
        %412 = sbr.rel (%p410) target = $region52
      $region51: #{tpu_custom_call.1} parent=5 // pred_region
        // Predicated region
        $region53: #{tpu_custom_call.1} parent=51 // pred_check
          %p413 = pneg %p50
        $region54: #{tpu_custom_call.1} parent=51 // pred_check_branch
          %415 = sbr.rel (%p413) target = $region56
        $region55: #{tpu_custom_call.1} parent=51 // pred_region
          %s416 = sand.u32 %s40, 1
          %s417 = scalar_lea.sflag [#allocation3], %s416
          %s418 = sand.u32 %s40, 1
          %s419 = smul.addr %s418, 8
          %s420 = scalar_lea.vmem [#allocation2], %s419
          %s422 = ssub.s32 128, 128
          %423 = vsyncadd %s417, %s422
          %s424 = smul.addr %s30, 128
          %s425 = scalar_lea.hbm %s0, %s424
          %s427 = sshll.u32 %s420, 4
          %s428 = int_to_ptr.vmem [resolvable:$true] %s427
          %430 = dma.hbm_to_vmem [thread:$0]  %s425, 128, %s428, %s417
        $region56: #{tpu_custom_call.1} parent=51 // pred_fallthru
          _
        // Predicated region
        $region57: #{tpu_custom_call.1} parent=51 // pred_check
          %p431 = pneg %p76
        $region58: #{tpu_custom_call.1} parent=51 // pred_check_branch
          %433 = sbr.rel (%p431) target = $region60
        $region59: #{tpu_custom_call.1} parent=51 // pred_region
          %s434 = sand.u32 %s30, 1
          %s435 = scalar_lea.sflag [#allocation6], %s434
          %s436 = sand.u32 %s66, 1
          %s437 = smul.addr %s436, 8
          %s438 = scalar_lea.vmem [#allocation5], %s437
          %s440 = ssub.s32 128, 128
          %441 = vsyncadd %s435, %s440
          %s442 = smul.addr %s30, 128
          %s443 = scalar_lea.hbm %s1, %s442
          %s445 = sshll.u32 %s438, 4
          %s446 = int_to_ptr.vmem [resolvable:$true] %s445
          %448 = dma.hbm_to_vmem [thread:$0]  %s443, 128, %s446, %s435
        $region60: #{tpu_custom_call.1} parent=51 // pred_fallthru
          _
        // Predicated region
        $region61: #{tpu_custom_call.1} parent=51 // pred_check
          %p449 = pneg %p102
        $region62: #{tpu_custom_call.1} parent=51 // pred_check_branch
          %451 = sbr.rel (%p449) target = $region64
        $region63: #{tpu_custom_call.1} parent=51 // pred_region
          %s452 = sand.u32 %s30, 1
          %s453 = scalar_lea.sflag [#allocation6], %s452
          %s454 = sand.u32 %s92, 1
          %s455 = smul.addr %s454, 8
          %s456 = scalar_lea.vmem [#allocation7], %s455
          %s458 = ssub.s32 128, 128
          %459 = vsyncadd %s453, %s458
          %s460 = smul.addr %s30, 128
          %s461 = scalar_lea.hbm %s2, %s460
          %s463 = sshll.u32 %s456, 4
          %s464 = int_to_ptr.vmem [resolvable:$true] %s463
          %466 = dma.hbm_to_vmem [thread:$0]  %s461, 128, %s464, %s453
        $region64: #{tpu_custom_call.1} parent=51 // pred_fallthru
          _
      $region52: #{tpu_custom_call.1} parent=5 // pred_fallthru
        _
      %p467 = scmp.le.s32.totalorder 1, %s30
      %p468 = scmp.lt.s32.totalorder %s30, 3
      %p469 = pnand %p467, %p468
      %p470 = pneg %p469
      // Predicated region
      $region65: #{tpu_custom_call.1} parent=5 // pred_check
        _
      $region66: #{tpu_custom_call.1} parent=5 // pred_check_branch
        %472 = sbr.rel (%p469) target = $region68
      $region67: #{tpu_custom_call.1} parent=5 // pred_region
        %s473 = ssub.s32 %s30, 1
        %s474 = sand.u32 %s43, 1
        %s475 = scalar_lea.sflag [#allocation3], %s474
        %s476 = sand.u32 %s43, 1
        %s477 = smul.addr %s476, 8
        %s478 = scalar_lea.vmem [#allocation2], %s477
        // Predicated region
        $region69: #{tpu_custom_call.1} parent=67 // pred_check
          %p479 = pneg %p56
        $region70: #{tpu_custom_call.1} parent=67 // pred_check_branch
          %481 = sbr.rel (%p479) target = $region72
        $region71: #{tpu_custom_call.1} parent=67 // pred_region
          %482 = dma.done %s475, 128
        $region72: #{tpu_custom_call.1} parent=67 // pred_fallthru
          _
        %s483 = sand.u32 %s35, 1
        %s484 = scalar_lea.sflag [#allocation6], %s483
        %s485 = sand.u32 %s69, 1
        %s486 = smul.addr %s485, 8
        %s487 = scalar_lea.vmem [#allocation5], %s486
        // Predicated region
        $region73: #{tpu_custom_call.1} parent=67 // pred_check
          %p488 = pneg %p82
        $region74: #{tpu_custom_call.1} parent=67 // pred_check_branch
          %490 = sbr.rel (%p488) target = $region76
        $region75: #{tpu_custom_call.1} parent=67 // pred_region
          %491 = dma.done %s484, 128
        $region76: #{tpu_custom_call.1} parent=67 // pred_fallthru
          _
        %s492 = sand.u32 %s35, 1
        %s493 = scalar_lea.sflag [#allocation6], %s492
        %s494 = sand.u32 %s95, 1
        %s495 = smul.addr %s494, 8
        %s496 = scalar_lea.vmem [#allocation7], %s495
        // Predicated region
        $region77: #{tpu_custom_call.1} parent=67 // pred_check
          %p497 = pneg %p108
        $region78: #{tpu_custom_call.1} parent=67 // pred_check_branch
          %499 = sbr.rel (%p497) target = $region80
        $region79: #{tpu_custom_call.1} parent=67 // pred_region
          %500 = dma.done %s493, 128
        $region80: #{tpu_custom_call.1} parent=67 // pred_fallthru
          _
        // Predicated region
        $region81: #{tpu_custom_call.1} parent=67 // pred_check
          %p501 = pneg %p150
        $region82: #{tpu_custom_call.1} parent=67 // pred_check_branch
          %503 = sbr.rel (%p501) target = $region84
        $region83: #{tpu_custom_call.1} parent=67 // pred_region
          %504 = dma.done [#allocation9], 16
        $region84: #{tpu_custom_call.1} parent=67 // pred_fallthru
          _
        // Predicated region
        $region85: #{tpu_custom_call.1} parent=67 // pred_check
          %p505 = pneg %p171
        $region86: #{tpu_custom_call.1} parent=67 // pred_check_branch
          %507 = sbr.rel (%p505) target = $region88
        $region87: #{tpu_custom_call.1} parent=67 // pred_region
          %508 = dma.done [#allocation9], 16
        $region88: #{tpu_custom_call.1} parent=67 // pred_fallthru
          _
        // Predicated region
        $region89: #{tpu_custom_call.1} parent=67 // pred_check
          %p509 = pneg %p213
        $region90: #{tpu_custom_call.1} parent=67 // pred_check_branch
          %511 = sbr.rel (%p509) target = $region92
        $region91: #{tpu_custom_call.1} parent=67 // pred_region
          %512 = dma.done [#allocation12], 256
        $region92: #{tpu_custom_call.1} parent=67 // pred_fallthru
          _
        // Predicated region
        $region93: #{tpu_custom_call.1} parent=67 // pred_check
          %p513 = pneg %p234
        $region94: #{tpu_custom_call.1} parent=67 // pred_check_branch
          %515 = sbr.rel (%p513) target = $region96
        $region95: #{tpu_custom_call.1} parent=67 // pred_region
          %516 = dma.done [#allocation12], 256
        $region96: #{tpu_custom_call.1} parent=67 // pred_fallthru
          _
        // Predicated region
        $region97: #{tpu_custom_call.1} parent=67 // pred_check
          %p517 = pneg %p276
        $region98: #{tpu_custom_call.1} parent=67 // pred_check_branch
          %519 = sbr.rel (%p517) target = $region100
        $region99: #{tpu_custom_call.1} parent=67 // pred_region
          %520 = dma.done [#allocation15], 128
        $region100: #{tpu_custom_call.1} parent=67 // pred_fallthru
          _
        %s521 = sand.u32 %s43, 1
        %s522 = scalar_lea.sflag [#allocation3], %s521
        %s523 = sand.u32 %s43, 1
        %s524 = smul.addr %s523, 8
        %s525 = scalar_lea.vmem [#allocation2], %s524
        %p526 = pneg %p56
        %p527 = pneg %p53
        %s528 = sand.u32 %s35, 1
        %s529 = scalar_lea.sflag [#allocation6], %s528
        %s530 = sand.u32 %s69, 1
        %s531 = smul.addr %s530, 8
        %s532 = scalar_lea.vmem [#allocation5], %s531
        %p533 = pneg %p82
        %p534 = pneg %p79
        %s535 = sand.u32 %s35, 1
        %s536 = scalar_lea.sflag [#allocation6], %s535
        %s537 = sand.u32 %s95, 1
        %s538 = smul.addr %s537, 8
        %s539 = scalar_lea.vmem [#allocation7], %s538
        %p540 = pneg %p108
        %p541 = pneg %p105
        %p542 = pneg %p129
        %p543 = pneg %p126
        %p544 = pneg %p150
        %p545 = pneg %p147
        %p546 = pneg %p171
        %p547 = pneg %p168
        %p548 = pneg %p192
        %p549 = pneg %p189
        %p550 = pneg %p213
        %p551 = pneg %p210
        %p552 = pneg %p234
        %p553 = pneg %p231
        %p554 = pneg %p255
        %p555 = pneg %p252
        %p556 = pneg %p276
        %p557 = pneg %p273
        %p558 = pneg %p297
        %p559 = pneg %p294
        %p560 = pneg %p323
        %p561 = pneg %p320
        %s562 = sand.u32 %s310, 1
        %s563 = scalar_lea.sflag [#allocation4], %s562
        %s564 = sand.u32 %s310, 1
        %s565 = smul.addr %s564, 8
        %s566 = scalar_lea.vmem [#allocation16], %s565
        %v568 = vld [vmem:[%s478] sm:$0xff]
        %v569 = vld [vmem:[%s3] sm:$0x1]
        %v570 = vmul.f32 %v568, %v568
        %vm571 = vcmask 261120
        %v572 = vsel %vm571, %v570, 0.0
        %573 = vadd.xlane.f32.xlu0 %v572
        %v574 = vpop.xlane.xlu0 %573
        %v575 = vrcp.pop 32.0
        %v576 = vmul.f32 %v574, %v575
        %v577 = vadd.f32 %v576, 1.1920929e-07
        %v578 = vrsqrt.pop %v577
        %v579 = vmul.f32 %v568, %v578
        %v581 = vlaneseq
        %v582 = vshrl.u32 %v581, 7
        %v583 = vsub.s32 0, %v582
        %v584 = vrot.slane %v569, %v583
        %v586 = vmul.f32 %v579, %v584
        %v587 = vpack.c.bf16 %v586, %v586
        %v588 = vld [vmem:[%s487] sm:$0xff]
        %v589 = vld [vmem:[#allocation8] sm:$0x1]
        %v590 = vmul.f32 %v588, %v588
        %v591 = vsel %vm571, %v590, 0.0
        %592 = vadd.xlane.f32.xlu0 %v591
        %v593 = vpop.xlane.xlu0 %592
        %v594 = vmul.f32 %v593, %v575
        %v595 = vadd.f32 %v594, 1.1920929e-07
        %v596 = vrsqrt.pop %v595
        %v597 = vmul.f32 %v588, %v596
        %v599 = vlaneseq
        %v600 = vshrl.u32 %v599, 7
        %v601 = vsub.s32 0, %v600
        %v602 = vrot.slane %v589, %v601
        %v604 = vmul.f32 %v597, %v602
        %v605 = vpack.c.bf16 %v604, %v604
        %v606 = vld [vmem:[%s496] sm:$0xff]
        %v607 = vld [vmem:[#allocation10] sm:$0x1]
        %v608 = vmul.f32 %v606, %v606
        %v609 = vsel %vm571, %v608, 0.0
        %610 = vadd.xlane.f32.xlu0 %v609
        %v611 = vpop.xlane.xlu0 %610
        %v612 = vmul.f32 %v611, %v575
        %v613 = vadd.f32 %v612, 1.1920929e-07
        %v614 = vrsqrt.pop %v613
        %v615 = vmul.f32 %v606, %v614
        %v617 = vlaneseq
        %v618 = vshrl.u32 %v617, 7
        %v619 = vsub.s32 0, %v618
        %v620 = vrot.slane %v607, %v619
        %v622 = vmul.f32 %v615, %v620
        %v623 = vpack.c.bf16 %v622, %v622
        %v624 = vld [vmem:[%s6] sm:$0xf]
        %v625 = vld [vmem:[%s6 + $0x4] sm:$0xf]
        %v626 = vld [vmem:[%s6 + $0x8] sm:$0xf]
        %v627 = vld [vmem:[%s6 + $0xc] sm:$0xf]
        %v632 = vunpack.c.l.b16 %v624
        %v633 = vunpack.c.l.b16 %v625
        %v634 = vunpack.c.l.b16 %v626
        %v635 = vunpack.c.l.b16 %v627
        %v636 = vpack.c.b16 %v633, %v632
        %v637 = vpack.c.b16 %v635, %v634
        %v641 = vsel %vm571, %v587, 0
        %643 = vmatprep.subr.bf16.mxu0 0
        %644 = vmatpush1.bf16.msra.mxu0 %v636
        %645 = vmatprep.subr.bf16.mxu0 0
        %646 = vmatpush1.bf16.msra.mxu0 %v637
        %647 = vmatprep.subr.bf16.mxu0 0
        %648 = vmatpush1.bf16.msra.mxu0 0
        %649 = vmatprep.subr.bf16.mxu0 0
        %650 = vmatpush1.bf16.msra.mxu0 0
        %651 = vmatprep.subr.bf16.mxu0 0
        %652 = vmatpush1.bf16.msra.mxu0 0
        %653 = vmatprep.subr.bf16.mxu0 0
        %654 = vmatpush1.bf16.msra.mxu0 0
        %655 = vmatprep.subr.bf16.mxu0 0
        %656 = vmatpush1.bf16.msra.mxu0 0
        %657 = vmatprep.subr.bf16.mxu0 0
        %658 = vmatpush1.bf16.msra.mxu0 0
        %659 = vmatprep.subr.bf16.mxu0 0
        %660 = vmatpush1.bf16.msra.mxu0 0
        %661 = vmatprep.subr.bf16.mxu0 0
        %662 = vmatpush1.bf16.msra.mxu0 0
        %663 = vmatprep.subr.bf16.mxu0 0
        %664 = vmatpush1.bf16.msra.mxu0 0
        %665 = vmatprep.subr.bf16.mxu0 0
        %666 = vmatpush1.bf16.msra.mxu0 0
        %667 = vmatprep.subr.bf16.mxu0 0
        %668 = vmatpush1.bf16.msra.mxu0 0
        %669 = vmatprep.subr.bf16.mxu0 0
        %670 = vmatpush1.bf16.msra.mxu0 0
        %671 = vmatprep.subr.bf16.mxu0 0
        %672 = vmatpush1.bf16.msra.mxu0 0
        %673 = vmatprep.subr.bf16.mxu0 0
        %674 = vmatpush1.bf16.msra.mxu0 0
        %675 = vmatprep.mubr.bf16.mxu0 0
        %676 = vmatmul.mubr.bf16.gmra.mrb[0].mxu0 %v641
        %v677 = vpop.f32.mrb[0].mxu0
        %v678 = vadd.f32 0.0, %v677
        %v679 = vpop.f32.mrb[0].mxu0
        %v680 = vpop.f32.mrb[0].mxu0
        %v681 = vpop.f32.mrb[0].mxu0
        %682 = vdwg.mxu0
        %v683 = vld [vmem:[#allocation11] sm:$0xf]
        %v684 = vld [vmem:[#allocation11 + $0x4] sm:$0xf]
        %v685 = vld [vmem:[#allocation11 + $0x8] sm:$0xf]
        %v686 = vld [vmem:[#allocation11 + $0xc] sm:$0xf]
        %v691 = vunpack.c.l.b16 %v683
        %v692 = vunpack.c.l.b16 %v684
        %v693 = vunpack.c.l.b16 %v685
        %v694 = vunpack.c.l.b16 %v686
        %v695 = vpack.c.b16 %v692, %v691
        %v696 = vpack.c.b16 %v694, %v693
        %v700 = vsel %vm571, %v605, 0
        %702 = vmatprep.subr.bf16.mxu0 0
        %703 = vmatpush1.bf16.msra.mxu0 %v695
        %704 = vmatprep.subr.bf16.mxu0 0
        %705 = vmatpush1.bf16.msra.mxu0 %v696
        %706 = vmatprep.subr.bf16.mxu0 0
        %707 = vmatpush1.bf16.msra.mxu0 0
        %708 = vmatprep.subr.bf16.mxu0 0
        %709 = vmatpush1.bf16.msra.mxu0 0
        %710 = vmatprep.subr.bf16.mxu0 0
        %711 = vmatpush1.bf16.msra.mxu0 0
        %712 = vmatprep.subr.bf16.mxu0 0
        %713 = vmatpush1.bf16.msra.mxu0 0
        %714 = vmatprep.subr.bf16.mxu0 0
        %715 = vmatpush1.bf16.msra.mxu0 0
        %716 = vmatprep.subr.bf16.mxu0 0
        %717 = vmatpush1.bf16.msra.mxu0 0
        %718 = vmatprep.subr.bf16.mxu0 0
        %719 = vmatpush1.bf16.msra.mxu0 0
        %720 = vmatprep.subr.bf16.mxu0 0
        %721 = vmatpush1.bf16.msra.mxu0 0
        %722 = vmatprep.subr.bf16.mxu0 0
        %723 = vmatpush1.bf16.msra.mxu0 0
        %724 = vmatprep.subr.bf16.mxu0 0
        %725 = vmatpush1.bf16.msra.mxu0 0
        %726 = vmatprep.subr.bf16.mxu0 0
        %727 = vmatpush1.bf16.msra.mxu0 0
        %728 = vmatprep.subr.bf16.mxu0 0
        %729 = vmatpush1.bf16.msra.mxu0 0
        %730 = vmatprep.subr.bf16.mxu0 0
        %731 = vmatpush1.bf16.msra.mxu0 0
        %732 = vmatprep.subr.bf16.mxu0 0
        %733 = vmatpush1.bf16.msra.mxu0 0
        %734 = vmatprep.mubr.bf16.mxu0 0
        %735 = vmatmul.mubr.bf16.gmra.mrb[0].mxu0 %v700
        %v736 = vpop.f32.mrb[0].mxu0
        %v737 = vadd.f32 0.0, %v736
        %v738 = vpop.f32.mrb[0].mxu0
        %v739 = vpop.f32.mrb[0].mxu0
        %v740 = vpop.f32.mrb[0].mxu0
        %741 = vdwg.mxu0
        %v742 = vld [vmem:[#allocation13] sm:$0xf]
        %v743 = vld [vmem:[#allocation13 + $0x4] sm:$0xf]
        %v744 = vld [vmem:[#allocation13 + $0x8] sm:$0xf]
        %v745 = vld [vmem:[#allocation13 + $0xc] sm:$0xf]
        %v750 = vunpack.c.l.b16 %v742
        %v751 = vunpack.c.l.b16 %v743
        %v752 = vunpack.c.l.b16 %v744
        %v753 = vunpack.c.l.b16 %v745
        %v754 = vpack.c.b16 %v751, %v750
        %v755 = vpack.c.b16 %v753, %v752
        %v759 = vsel %vm571, %v623, 0
        %761 = vmatprep.subr.bf16.mxu0 0
        %762 = vmatpush1.bf16.msra.mxu0 %v754
        %763 = vmatprep.subr.bf16.mxu0 0
        %764 = vmatpush1.bf16.msra.mxu0 %v755
        %765 = vmatprep.subr.bf16.mxu0 0
        %766 = vmatpush1.bf16.msra.mxu0 0
        %767 = vmatprep.subr.bf16.mxu0 0
        %768 = vmatpush1.bf16.msra.mxu0 0
        %769 = vmatprep.subr.bf16.mxu0 0
        %770 = vmatpush1.bf16.msra.mxu0 0
        %771 = vmatprep.subr.bf16.mxu0 0
        %772 = vmatpush1.bf16.msra.mxu0 0
        %773 = vmatprep.subr.bf16.mxu0 0
        %774 = vmatpush1.bf16.msra.mxu0 0
        %775 = vmatprep.subr.bf16.mxu0 0
        %776 = vmatpush1.bf16.msra.mxu0 0
        %777 = vmatprep.subr.bf16.mxu0 0
        %778 = vmatpush1.bf16.msra.mxu0 0
        %779 = vmatprep.subr.bf16.mxu0 0
        %780 = vmatpush1.bf16.msra.mxu0 0
        %781 = vmatprep.subr.bf16.mxu0 0
        %782 = vmatpush1.bf16.msra.mxu0 0
        %783 = vmatprep.subr.bf16.mxu0 0
        %784 = vmatpush1.bf16.msra.mxu0 0
        %785 = vmatprep.subr.bf16.mxu0 0
        %786 = vmatpush1.bf16.msra.mxu0 0
        %787 = vmatprep.subr.bf16.mxu0 0
        %788 = vmatpush1.bf16.msra.mxu0 0
        %789 = vmatprep.subr.bf16.mxu0 0
        %790 = vmatpush1.bf16.msra.mxu0 0
        %791 = vmatprep.subr.bf16.mxu0 0
        %792 = vmatpush1.bf16.msra.mxu0 0
        %793 = vmatprep.mubr.bf16.mxu0 0
        %794 = vmatmul.mubr.bf16.gmra.mrb[0].mxu0 %v759
        %v795 = vpop.f32.mrb[0].mxu0
        %v796 = vadd.f32 0.0, %v795
        %v797 = vpop.f32.mrb[0].mxu0
        %v798 = vpop.f32.mrb[0].mxu0
        %v799 = vpop.f32.mrb[0].mxu0
        %800 = vdwg.mxu0
        %v801 = vld [vmem:[#allocation14] sm:$0xff]
        %v802 = vld [vmem:[%s11] sm:$0xff]
        %v803 = vlaneseq
        %v804 = vshrl.u32 %v803, 7
        %v805 = vlaneseq
        %v806 = vand.u32 %v805, 127
        %vm807 = vcmp.le.s32.totalorder %v806, %v804
        %809 = vrot.lane.b32.xlu0 %v678, 124
        %v810 = vpop.permute.xlu0 %809
        %812 = vrot.lane.b32.xlu0 %v678, 4
        %v813 = vpop.permute.xlu0 %812
        %vm815 = vcmask 31744
        %v816 = vsel %vm815, %v810, %v813
        %v817 = vmul.f32 %v678, %v801
        %v818 = vmul.f32 %v816, %v802
        %v819 = vadd.f32 %v817, %v818
        %821 = vrot.lane.b32.xlu0 %v737, 124
        %v822 = vpop.permute.xlu0 %821
        %824 = vrot.lane.b32.xlu0 %v737, 4
        %v825 = vpop.permute.xlu0 %824
        %v827 = vsel %vm815, %v822, %v825
        %v828 = vmul.f32 %v737, %v801
        %v829 = vmul.f32 %v827, %v802
        %v830 = vadd.f32 %v828, %v829
        %v831 = vpack.c.bf16 %v819, %v819
        %v832 = vpack.c.bf16 %v830, %v830
        %vm833 = vcmask 64512
        %v835 = vsel %vm833, %v831, 0
        %v838 = vsel %vm833, %v832, 0
        %840 = vmatprep.subr.bf16.mxu0 0
        %841 = vmatpush1.bf16.xpose.msra.mxu0 %v838
        %842 = vmatprep.subr.bf16.mxu0 0
        %843 = vmatpush1.bf16.xpose.msra.mxu0 0
        %844 = vmatprep.subr.bf16.mxu0 0
        %845 = vmatpush1.bf16.xpose.msra.mxu0 0
        %846 = vmatprep.subr.bf16.mxu0 0
        %847 = vmatpush1.bf16.xpose.msra.mxu0 0
        %848 = vmatprep.subr.bf16.mxu0 0
        %849 = vmatpush1.bf16.xpose.msra.mxu0 0
        %850 = vmatprep.subr.bf16.mxu0 0
        %851 = vmatpush1.bf16.xpose.msra.mxu0 0
        %852 = vmatprep.subr.bf16.mxu0 0
        %853 = vmatpush1.bf16.xpose.msra.mxu0 0
        %854 = vmatprep.subr.bf16.mxu0 0
        %855 = vmatpush1.bf16.xpose.msra.mxu0 0
        %856 = vmatprep.subr.bf16.mxu0 0
        %857 = vmatpush1.bf16.xpose.msra.mxu0 0
        %858 = vmatprep.subr.bf16.mxu0 0
        %859 = vmatpush1.bf16.xpose.msra.mxu0 0
        %860 = vmatprep.subr.bf16.mxu0 0
        %861 = vmatpush1.bf16.xpose.msra.mxu0 0
        %862 = vmatprep.subr.bf16.mxu0 0
        %863 = vmatpush1.bf16.xpose.msra.mxu0 0
        %864 = vmatprep.subr.bf16.mxu0 0
        %865 = vmatpush1.bf16.xpose.msra.mxu0 0
        %866 = vmatprep.subr.bf16.mxu0 0
        %867 = vmatpush1.bf16.xpose.msra.mxu0 0
        %868 = vmatprep.subr.bf16.mxu0 0
        %869 = vmatpush1.bf16.xpose.msra.mxu0 0
        %870 = vmatprep.subr.bf16.mxu0 0
        %871 = vmatpush1.bf16.xpose.msra.mxu0 0
        %872 = vmatprep.mubr.bf16.mxu0 0
        %873 = vmatmul.mubr.bf16.gmra.mrb[0].mxu0 %v835
        %v874 = vpop.f32.mrb[0].mxu0
        %v875 = vadd.f32 0.0, %v874
        %v876 = vpop.f32.mrb[0].mxu0
        %v877 = vpop.f32.mrb[0].mxu0
        %v878 = vpop.f32.mrb[0].mxu0
        %879 = vdwg.mxu0
        %v880 = vmul.f32 %v875, 0.35355338
        %v881 = vsel %vm807, %v880, -1e+30
        %v882 = vsel %vm833, %v881, -inf
        %883 = vmax.xlane.f32.xlu0 %v882
        %v884 = vpop.xlane.xlu0 %883
        %v885 = vsub.f32 %v881, %v884
        %v886 = vmul.f32 %v885, 1.442695
        %v887 = vpow.pop %v886
        %v888 = vsel %vm833, %v887, 0.0
        %889 = vadd.xlane.f32.xlu0 %v888
        %v890 = vpop.xlane.xlu0 %889
        %v891 = vrcp.pop %v890
        %v892 = vmul.f32 %v887, %v891
        %v893 = vpack.c.bf16 %v892, %v892
        %v894 = vpack.c.bf16 %v796, %v796
        %v896 = vsel %vm833, %v893, 0
        %vm898 = vcmask 1043456
        %v900 = vsel %vm898, %v894, 0
        %902 = vmatprep.subr.bf16.mxu0 0
        %903 = vmatpush1.bf16.msra.mxu0 %v900
        %904 = vmatprep.subr.bf16.mxu0 0
        %905 = vmatpush1.bf16.msra.mxu0 0
        %906 = vmatprep.subr.bf16.mxu0 0
        %907 = vmatpush1.bf16.msra.mxu0 0
        %908 = vmatprep.subr.bf16.mxu0 0
        %909 = vmatpush1.bf16.msra.mxu0 0
        %910 = vmatprep.subr.bf16.mxu0 0
        %911 = vmatpush1.bf16.msra.mxu0 0
        %912 = vmatprep.subr.bf16.mxu0 0
        %913 = vmatpush1.bf16.msra.mxu0 0
        %914 = vmatprep.subr.bf16.mxu0 0
        %915 = vmatpush1.bf16.msra.mxu0 0
        %916 = vmatprep.subr.bf16.mxu0 0
        %917 = vmatpush1.bf16.msra.mxu0 0
        %918 = vmatprep.subr.bf16.mxu0 0
        %919 = vmatpush1.bf16.msra.mxu0 0
        %920 = vmatprep.subr.bf16.mxu0 0
        %921 = vmatpush1.bf16.msra.mxu0 0
        %922 = vmatprep.subr.bf16.mxu0 0
        %923 = vmatpush1.bf16.msra.mxu0 0
        %924 = vmatprep.subr.bf16.mxu0 0
        %925 = vmatpush1.bf16.msra.mxu0 0
        %926 = vmatprep.subr.bf16.mxu0 0
        %927 = vmatpush1.bf16.msra.mxu0 0
        %928 = vmatprep.subr.bf16.mxu0 0
        %929 = vmatpush1.bf16.msra.mxu0 0
        %930 = vmatprep.subr.bf16.mxu0 0
        %931 = vmatpush1.bf16.msra.mxu0 0
        %932 = vmatprep.subr.bf16.mxu0 0
        %933 = vmatpush1.bf16.msra.mxu0 0
        %934 = vmatprep.mubr.bf16.mxu0 0
        %935 = vmatmul.mubr.bf16.gmra.mrb[0].mxu0 %v896
        %v936 = vpop.f32.mrb[0].mxu0
        %v937 = vadd.f32 0.0, %v936
        %v938 = vpop.f32.mrb[0].mxu0
        %v939 = vpop.f32.mrb[0].mxu0
        %v940 = vpop.f32.mrb[0].mxu0
        %941 = vdwg.mxu0
        %942 = vrot.lane.b32.xlu0 %v678, 116
        %v943 = vpop.permute.xlu0 %942
        %v945 = vsel %vm815, %v943, %v810
        %947 = vrot.lane.b32.xlu0 %v801, 8
        %v948 = vpop.permute.xlu0 %947
        %v950 = vmul.f32 %v678, %v948
        %v951 = vmul.f32 %v945, %v802
        %953 = vrot.lane.b32.xlu0 %v951, 8
        %v954 = vpop.permute.xlu0 %953
        %v956 = vadd.f32 %v950, %v954
        %957 = vrot.lane.b32.xlu0 %v737, 116
        %v958 = vpop.permute.xlu0 %957
        %v960 = vsel %vm815, %v958, %v822
        %v961 = vmul.f32 %v737, %v948
        %v962 = vmul.f32 %v960, %v802
        %964 = vrot.lane.b32.xlu0 %v962, 8
        %v965 = vpop.permute.xlu0 %964
        %v967 = vadd.f32 %v961, %v965
        %v968 = vpack.c.bf16 %v956, %v956
        %v969 = vpack.c.bf16 %v967, %v967
        %971 = vrot.lane.b32.xlu0 %v968, 120
        %v972 = vpop.permute.xlu0 %971
        %974 = vrot.lane.b32.xlu0 %v969, 120
        %v975 = vpop.permute.xlu0 %974
        %v977 = vsel %vm833, %v972, 0
        %v980 = vsel %vm833, %v975, 0
        %982 = vmatprep.subr.bf16.mxu0 0
        %983 = vmatpush1.bf16.xpose.msra.mxu0 %v980
        %984 = vmatprep.subr.bf16.mxu0 0
        %985 = vmatpush1.bf16.xpose.msra.mxu0 0
        %986 = vmatprep.subr.bf16.mxu0 0
        %987 = vmatpush1.bf16.xpose.msra.mxu0 0
        %988 = vmatprep.subr.bf16.mxu0 0
        %989 = vmatpush1.bf16.xpose.msra.mxu0 0
        %990 = vmatprep.subr.bf16.mxu0 0
        %991 = vmatpush1.bf16.xpose.msra.mxu0 0
        %992 = vmatprep.subr.bf16.mxu0 0
        %993 = vmatpush1.bf16.xpose.msra.mxu0 0
        %994 = vmatprep.subr.bf16.mxu0 0
        %995 = vmatpush1.bf16.xpose.msra.mxu0 0
        %996 = vmatprep.subr.bf16.mxu0 0
        %997 = vmatpush1.bf16.xpose.msra.mxu0 0
        %998 = vmatprep.subr.bf16.mxu0 0
        %999 = vmatpush1.bf16.xpose.msra.mxu0 0
        %1000 = vmatprep.subr.bf16.mxu0 0
        %1001 = vmatpush1.bf16.xpose.msra.mxu0 0
        %1002 = vmatprep.subr.bf16.mxu0 0
        %1003 = vmatpush1.bf16.xpose.msra.mxu0 0
        %1004 = vmatprep.subr.bf16.mxu0 0
        %1005 = vmatpush1.bf16.xpose.msra.mxu0 0
        %1006 = vmatprep.subr.bf16.mxu0 0
        %1007 = vmatpush1.bf16.xpose.msra.mxu0 0
        %1008 = vmatprep.subr.bf16.mxu0 0
        %1009 = vmatpush1.bf16.xpose.msra.mxu0 0
        %1010 = vmatprep.subr.bf16.mxu0 0
        %1011 = vmatpush1.bf16.xpose.msra.mxu0 0
        %1012 = vmatprep.subr.bf16.mxu0 0
        %1013 = vmatpush1.bf16.xpose.msra.mxu0 0
        %1014 = vmatprep.mubr.bf16.mxu0 0
        %1015 = vmatmul.mubr.bf16.gmra.mrb[0].mxu0 %v977
        %v1016 = vpop.f32.mrb[0].mxu0
        %v1017 = vadd.f32 0.0, %v1016
        %v1018 = vpop.f32.mrb[0].mxu0
        %v1019 = vpop.f32.mrb[0].mxu0
        %v1020 = vpop.f32.mrb[0].mxu0
        %1021 = vdwg.mxu0
        %v1022 = vmul.f32 %v1017, 0.35355338
        %v1023 = vsel %vm807, %v1022, -1e+30
        %v1024 = vsel %vm833, %v1023, -inf
        %1025 = vmax.xlane.f32.xlu0 %v1024
        %v1026 = vpop.xlane.xlu0 %1025
        %v1027 = vsub.f32 %v1023, %v1026
        %v1028 = vmul.f32 %v1027, 1.442695
        %v1029 = vpow.pop %v1028
        %v1030 = vsel %vm833, %v1029, 0.0
        %1031 = vadd.xlane.f32.xlu0 %v1030
        %v1032 = vpop.xlane.xlu0 %1031
        %v1033 = vrcp.pop %v1032
        %v1034 = vmul.f32 %v1029, %v1033
        %v1035 = vpack.c.bf16 %v1034, %v1034
        %1037 = vrot.lane.b32.xlu0 %v894, 120
        %v1038 = vpop.permute.xlu0 %1037
        %v1040 = vsel %vm833, %v1035, 0
        %v1043 = vsel %vm898, %v1038, 0
        %1045 = vmatprep.subr.bf16.mxu0 0
        %1046 = vmatpush1.bf16.msra.mxu0 %v1043
        %1047 = vmatprep.subr.bf16.mxu0 0
        %1048 = vmatpush1.bf16.msra.mxu0 0
        %1049 = vmatprep.subr.bf16.mxu0 0
        %1050 = vmatpush1.bf16.msra.mxu0 0
        %1051 = vmatprep.subr.bf16.mxu0 0
        %1052 = vmatpush1.bf16.msra.mxu0 0
        %1053 = vmatprep.subr.bf16.mxu0 0
        %1054 = vmatpush1.bf16.msra.mxu0 0
        %1055 = vmatprep.subr.bf16.mxu0 0
        %1056 = vmatpush1.bf16.msra.mxu0 0
        %1057 = vmatprep.subr.bf16.mxu0 0
        %1058 = vmatpush1.bf16.msra.mxu0 0
        %1059 = vmatprep.subr.bf16.mxu0 0
        %1060 = vmatpush1.bf16.msra.mxu0 0
        %1061 = vmatprep.subr.bf16.mxu0 0
        %1062 = vmatpush1.bf16.msra.mxu0 0
        %1063 = vmatprep.subr.bf16.mxu0 0
        %1064 = vmatpush1.bf16.msra.mxu0 0
        %1065 = vmatprep.subr.bf16.mxu0 0
        %1066 = vmatpush1.bf16.msra.mxu0 0
        %1067 = vmatprep.subr.bf16.mxu0 0
        %1068 = vmatpush1.bf16.msra.mxu0 0
        %1069 = vmatprep.subr.bf16.mxu0 0
        %1070 = vmatpush1.bf16.msra.mxu0 0
        %1071 = vmatprep.subr.bf16.mxu0 0
        %1072 = vmatpush1.bf16.msra.mxu0 0
        %1073 = vmatprep.subr.bf16.mxu0 0
        %1074 = vmatpush1.bf16.msra.mxu0 0
        %1075 = vmatprep.subr.bf16.mxu0 0
        %1076 = vmatpush1.bf16.msra.mxu0 0
        %1077 = vmatprep.mubr.bf16.mxu0 0
        %1078 = vmatmul.mubr.bf16.gmra.mrb[0].mxu0 %v1040
        %v1079 = vpop.f32.mrb[0].mxu0
        %v1080 = vadd.f32 0.0, %v1079
        %v1081 = vpop.f32.mrb[0].mxu0
        %v1082 = vpop.f32.mrb[0].mxu0
        %v1083 = vpop.f32.mrb[0].mxu0
        %1084 = vdwg.mxu0
        %1085 = vrot.lane.b32.xlu0 %v678, 108
        %v1086 = vpop.permute.xlu0 %1085
        %v1088 = vsel %vm815, %v1086, %v943
        %1089 = vrot.lane.b32.xlu0 %v801, 16
        %v1090 = vpop.permute.xlu0 %1089
        %v1092 = vmul.f32 %v678, %v1090
        %v1093 = vmul.f32 %v1088, %v802
        %1095 = vrot.lane.b32.xlu0 %v1093, 16
        %v1096 = vpop.permute.xlu0 %1095
        %v1098 = vadd.f32 %v1092, %v1096
        %1099 = vrot.lane.b32.xlu0 %v737, 108
        %v1100 = vpop.permute.xlu0 %1099
        %v1102 = vsel %vm815, %v1100, %v958
        %v1103 = vmul.f32 %v737, %v1090
        %v1104 = vmul.f32 %v1102, %v802
        %1106 = vrot.lane.b32.xlu0 %v1104, 16
        %v1107 = vpop.permute.xlu0 %1106
        %v1109 = vadd.f32 %v1103, %v1107
        %v1110 = vpack.c.bf16 %v1098, %v1098
        %v1111 = vpack.c.bf16 %v1109, %v1109
        %1113 = vrot.lane.b32.xlu0 %v1110, 112
        %v1114 = vpop.permute.xlu0 %1113
        %1116 = vrot.lane.b32.xlu0 %v1111, 112
        %v1117 = vpop.permute.xlu0 %1116
        %v1119 = vsel %vm833, %v1114, 0
        %v1122 = vsel %vm833, %v1117, 0
        %1124 = vmatprep.subr.bf16.mxu0 0
        %1125 = vmatpush1.bf16.xpose.msra.mxu0 %v1122
        %1126 = vmatprep.subr.bf16.mxu0 0
        %1127 = vmatpush1.bf16.xpose.msra.mxu0 0
        %1128 = vmatprep.subr.bf16.mxu0 0
        %1129 = vmatpush1.bf16.xpose.msra.mxu0 0
        %1130 = vmatprep.subr.bf16.mxu0 0
        %1131 = vmatpush1.bf16.xpose.msra.mxu0 0
        %1132 = vmatprep.subr.bf16.mxu0 0
        %1133 = vmatpush1.bf16.xpose.msra.mxu0 0
        %1134 = vmatprep.subr.bf16.mxu0 0
        %1135 = vmatpush1.bf16.xpose.msra.mxu0 0
        %1136 = vmatprep.subr.bf16.mxu0 0
        %1137 = vmatpush1.bf16.xpose.msra.mxu0 0
        %1138 = vmatprep.subr.bf16.mxu0 0
        %1139 = vmatpush1.bf16.xpose.msra.mxu0 0
        %1140 = vmatprep.subr.bf16.mxu0 0
        %1141 = vmatpush1.bf16.xpose.msra.mxu0 0
        %1142 = vmatprep.subr.bf16.mxu0 0
        %1143 = vmatpush1.bf16.xpose.msra.mxu0 0
        %1144 = vmatprep.subr.bf16.mxu0 0
        %1145 = vmatpush1.bf16.xpose.msra.mxu0 0
        %1146 = vmatprep.subr.bf16.mxu0 0
        %1147 = vmatpush1.bf16.xpose.msra.mxu0 0
        %1148 = vmatprep.subr.bf16.mxu0 0
        %1149 = vmatpush1.bf16.xpose.msra.mxu0 0
        %1150 = vmatprep.subr.bf16.mxu0 0
        %1151 = vmatpush1.bf16.xpose.msra.mxu0 0
        %1152 = vmatprep.subr.bf16.mxu0 0
        %1153 = vmatpush1.bf16.xpose.msra.mxu0 0
        %1154 = vmatprep.subr.bf16.mxu0 0
        %1155 = vmatpush1.bf16.xpose.msra.mxu0 0
        %1156 = vmatprep.mubr.bf16.mxu0 0
        %1157 = vmatmul.mubr.bf16.gmra.mrb[0].mxu0 %v1119
        %v1158 = vpop.f32.mrb[0].mxu0
        %v1159 = vadd.f32 0.0, %v1158
        %v1160 = vpop.f32.mrb[0].mxu0
        %v1161 = vpop.f32.mrb[0].mxu0
        %v1162 = vpop.f32.mrb[0].mxu0
        %1163 = vdwg.mxu0
        %v1164 = vmul.f32 %v1159, 0.35355338
        %v1165 = vsel %vm807, %v1164, -1e+30
        %v1166 = vsel %vm833, %v1165, -inf
        %1167 = vmax.xlane.f32.xlu0 %v1166
        %v1168 = vpop.xlane.xlu0 %1167
        %v1169 = vsub.f32 %v1165, %v1168
        %v1170 = vmul.f32 %v1169, 1.442695
        %v1171 = vpow.pop %v1170
        %v1172 = vsel %vm833, %v1171, 0.0
        %1173 = vadd.xlane.f32.xlu0 %v1172
        %v1174 = vpop.xlane.xlu0 %1173
        %v1175 = vrcp.pop %v1174
        %v1176 = vmul.f32 %v1171, %v1175
        %v1177 = vpack.c.bf16 %v1176, %v1176
        %1178 = vrot.lane.b32.xlu0 %v894, 112
        %v1179 = vpop.permute.xlu0 %1178
        %v1181 = vsel %vm833, %v1177, 0
        %v1184 = vsel %vm898, %v1179, 0
        %1186 = vmatprep.subr.bf16.mxu0 0
        %1187 = vmatpush1.bf16.msra.mxu0 %v1184
        %1188 = vmatprep.subr.bf16.mxu0 0
        %1189 = vmatpush1.bf16.msra.mxu0 0
        %1190 = vmatprep.subr.bf16.mxu0 0
        %1191 = vmatpush1.bf16.msra.mxu0 0
        %1192 = vmatprep.subr.bf16.mxu0 0
        %1193 = vmatpush1.bf16.msra.mxu0 0
        %1194 = vmatprep.subr.bf16.mxu0 0
        %1195 = vmatpush1.bf16.msra.mxu0 0
        %1196 = vmatprep.subr.bf16.mxu0 0
        %1197 = vmatpush1.bf16.msra.mxu0 0
        %1198 = vmatprep.subr.bf16.mxu0 0
        %1199 = vmatpush1.bf16.msra.mxu0 0
        %1200 = vmatprep.subr.bf16.mxu0 0
        %1201 = vmatpush1.bf16.msra.mxu0 0
        %1202 = vmatprep.subr.bf16.mxu0 0
        %1203 = vmatpush1.bf16.msra.mxu0 0
        %1204 = vmatprep.subr.bf16.mxu0 0
        %1205 = vmatpush1.bf16.msra.mxu0 0
        %1206 = vmatprep.subr.bf16.mxu0 0
        %1207 = vmatpush1.bf16.msra.mxu0 0
        %1208 = vmatprep.subr.bf16.mxu0 0
        %1209 = vmatpush1.bf16.msra.mxu0 0
        %1210 = vmatprep.subr.bf16.mxu0 0
        %1211 = vmatpush1.bf16.msra.mxu0 0
        %1212 = vmatprep.subr.bf16.mxu0 0
        %1213 = vmatpush1.bf16.msra.mxu0 0
        %1214 = vmatprep.subr.bf16.mxu0 0
        %1215 = vmatpush1.bf16.msra.mxu0 0
        %1216 = vmatprep.subr.bf16.mxu0 0
        %1217 = vmatpush1.bf16.msra.mxu0 0
        %1218 = vmatprep.mubr.bf16.mxu0 0
        %1219 = vmatmul.mubr.bf16.gmra.mrb[0].mxu0 %v1181
        %v1220 = vpop.f32.mrb[0].mxu0
        %v1221 = vadd.f32 0.0, %v1220
        %v1222 = vpop.f32.mrb[0].mxu0
        %v1223 = vpop.f32.mrb[0].mxu0
        %v1224 = vpop.f32.mrb[0].mxu0
        %1225 = vdwg.mxu0
        %1226 = vrot.lane.b32.xlu0 %v678, 100
        %v1227 = vpop.permute.xlu0 %1226
        %v1229 = vsel %vm815, %v1227, %v1086
        %1230 = vrot.lane.b32.xlu0 %v801, 24
        %v1231 = vpop.permute.xlu0 %1230
        %v1233 = vmul.f32 %v678, %v1231
        %v1234 = vmul.f32 %v1229, %v802
        %1236 = vrot.lane.b32.xlu0 %v1234, 24
        %v1237 = vpop.permute.xlu0 %1236
        %v1239 = vadd.f32 %v1233, %v1237
        %1240 = vrot.lane.b32.xlu0 %v737, 100
        %v1241 = vpop.permute.xlu0 %1240
        %v1243 = vsel %vm815, %v1241, %v1100
        %v1244 = vmul.f32 %v737, %v1231
        %v1245 = vmul.f32 %v1243, %v802
        %1247 = vrot.lane.b32.xlu0 %v1245, 24
        %v1248 = vpop.permute.xlu0 %1247
        %v1250 = vadd.f32 %v1244, %v1248
        %v1251 = vpack.c.bf16 %v1239, %v1239
        %v1252 = vpack.c.bf16 %v1250, %v1250
        %1254 = vrot.lane.b32.xlu0 %v1251, 104
        %v1255 = vpop.permute.xlu0 %1254
        %1257 = vrot.lane.b32.xlu0 %v1252, 104
        %v1258 = vpop.permute.xlu0 %1257
        %v1260 = vsel %vm833, %v1255, 0
        %v1263 = vsel %vm833, %v1258, 0
        %1265 = vmatprep.subr.bf16.mxu0 0
        %1266 = vmatpush1.bf16.xpose.msra.mxu0 %v1263
        %1267 = vmatprep.subr.bf16.mxu0 0
        %1268 = vmatpush1.bf16.xpose.msra.mxu0 0
        %1269 = vmatprep.subr.bf16.mxu0 0
        %1270 = vmatpush1.bf16.xpose.msra.mxu0 0
        %1271 = vmatprep.subr.bf16.mxu0 0
        %1272 = vmatpush1.bf16.xpose.msra.mxu0 0
        %1273 = vmatprep.subr.bf16.mxu0 0
        %1274 = vmatpush1.bf16.xpose.msra.mxu0 0
        %1275 = vmatprep.subr.bf16.mxu0 0
        %1276 = vmatpush1.bf16.xpose.msra.mxu0 0
        %1277 = vmatprep.subr.bf16.mxu0 0
        %1278 = vmatpush1.bf16.xpose.msra.mxu0 0
        %1279 = vmatprep.subr.bf16.mxu0 0
        %1280 = vmatpush1.bf16.xpose.msra.mxu0 0
        %1281 = vmatprep.subr.bf16.mxu0 0
        %1282 = vmatpush1.bf16.xpose.msra.mxu0 0
        %1283 = vmatprep.subr.bf16.mxu0 0
        %1284 = vmatpush1.bf16.xpose.msra.mxu0 0
        %1285 = vmatprep.subr.bf16.mxu0 0
        %1286 = vmatpush1.bf16.xpose.msra.mxu0 0
        %1287 = vmatprep.subr.bf16.mxu0 0
        %1288 = vmatpush1.bf16.xpose.msra.mxu0 0
        %1289 = vmatprep.subr.bf16.mxu0 0
        %1290 = vmatpush1.bf16.xpose.msra.mxu0 0
        %1291 = vmatprep.subr.bf16.mxu0 0
        %1292 = vmatpush1.bf16.xpose.msra.mxu0 0
        %1293 = vmatprep.subr.bf16.mxu0 0
        %1294 = vmatpush1.bf16.xpose.msra.mxu0 0
        %1295 = vmatprep.subr.bf16.mxu0 0
        %1296 = vmatpush1.bf16.xpose.msra.mxu0 0
        %1297 = vmatprep.mubr.bf16.mxu0 0
        %1298 = vmatmul.mubr.bf16.gmra.mrb[0].mxu0 %v1260
        %v1299 = vpop.f32.mrb[0].mxu0
        %v1300 = vadd.f32 0.0, %v1299
        %v1301 = vpop.f32.mrb[0].mxu0
        %v1302 = vpop.f32.mrb[0].mxu0
        %v1303 = vpop.f32.mrb[0].mxu0
        %1304 = vdwg.mxu0
        %v1305 = vmul.f32 %v1300, 0.35355338
        %v1306 = vsel %vm807, %v1305, -1e+30
        %v1307 = vsel %vm833, %v1306, -inf
        %1308 = vmax.xlane.f32.xlu0 %v1307
        %v1309 = vpop.xlane.xlu0 %1308
        %v1310 = vsub.f32 %v1306, %v1309
        %v1311 = vmul.f32 %v1310, 1.442695
        %v1312 = vpow.pop %v1311
        %v1313 = vsel %vm833, %v1312, 0.0
        %1314 = vadd.xlane.f32.xlu0 %v1313
        %v1315 = vpop.xlane.xlu0 %1314
        %v1316 = vrcp.pop %v1315
        %v1317 = vmul.f32 %v1312, %v1316
        %v1318 = vpack.c.bf16 %v1317, %v1317
        %1319 = vrot.lane.b32.xlu0 %v894, 104
        %v1320 = vpop.permute.xlu0 %1319
        %v1322 = vsel %vm833, %v1318, 0
        %v1325 = vsel %vm898, %v1320, 0
        %1327 = vmatprep.subr.bf16.mxu0 0
        %1328 = vmatpush1.bf16.msra.mxu0 %v1325
        %1329 = vmatprep.subr.bf16.mxu0 0
        %1330 = vmatpush1.bf16.msra.mxu0 0
        %1331 = vmatprep.subr.bf16.mxu0 0
        %1332 = vmatpush1.bf16.msra.mxu0 0
        %1333 = vmatprep.subr.bf16.mxu0 0
        %1334 = vmatpush1.bf16.msra.mxu0 0
        %1335 = vmatprep.subr.bf16.mxu0 0
        %1336 = vmatpush1.bf16.msra.mxu0 0
        %1337 = vmatprep.subr.bf16.mxu0 0
        %1338 = vmatpush1.bf16.msra.mxu0 0
        %1339 = vmatprep.subr.bf16.mxu0 0
        %1340 = vmatpush1.bf16.msra.mxu0 0
        %1341 = vmatprep.subr.bf16.mxu0 0
        %1342 = vmatpush1.bf16.msra.mxu0 0
        %1343 = vmatprep.subr.bf16.mxu0 0
        %1344 = vmatpush1.bf16.msra.mxu0 0
        %1345 = vmatprep.subr.bf16.mxu0 0
        %1346 = vmatpush1.bf16.msra.mxu0 0
        %1347 = vmatprep.subr.bf16.mxu0 0
        %1348 = vmatpush1.bf16.msra.mxu0 0
        %1349 = vmatprep.subr.bf16.mxu0 0
        %1350 = vmatpush1.bf16.msra.mxu0 0
        %1351 = vmatprep.subr.bf16.mxu0 0
        %1352 = vmatpush1.bf16.msra.mxu0 0
        %1353 = vmatprep.subr.bf16.mxu0 0
        %1354 = vmatpush1.bf16.msra.mxu0 0
        %1355 = vmatprep.subr.bf16.mxu0 0
        %1356 = vmatpush1.bf16.msra.mxu0 0
        %1357 = vmatprep.subr.bf16.mxu0 0
        %1358 = vmatpush1.bf16.msra.mxu0 0
        %1359 = vmatprep.mubr.bf16.mxu0 0
        %1360 = vmatmul.mubr.bf16.gmra.mrb[0].mxu0 %v1322
        %v1361 = vpop.f32.mrb[0].mxu0
        %v1362 = vadd.f32 0.0, %v1361
        %v1363 = vpop.f32.mrb[0].mxu0
        %v1364 = vpop.f32.mrb[0].mxu0
        %v1365 = vpop.f32.mrb[0].mxu0
        %1366 = vdwg.mxu0
        %1368 = vrot.lane.b32.xlu0 %v1080, 8
        %v1369 = vpop.permute.xlu0 %1368
        %1372 = vrot.lane.b32.xlu0 %v1221, 16
        %v1373 = vpop.permute.xlu0 %1372
        %1376 = vrot.lane.b32.xlu0 %v1362, 24
        %v1377 = vpop.permute.xlu0 %1376
        %v1379 = vsel %vm833, %v937, %v1369
        %vm1380 = vcmask 130048
        %v1381 = vsel %vm1380, %v1379, %v1373
        %vm1382 = vcmask 195584
        %v1383 = vsel %vm1382, %v1381, %v1377
        %v1384 = vpack.c.bf16 %v1383, %v1383
        %v1385 = vld [vmem:[%s9] sm:$0xf]
        %v1386 = vld [vmem:[%s9 + $0x4] sm:$0xf]
        %v1387 = vld [vmem:[%s9 + $0x8] sm:$0xf]
        %v1388 = vld [vmem:[%s9 + $0xc] sm:$0xf]
        %v1393 = vunpack.c.l.b16 %v1385
        %v1394 = vunpack.c.l.b16 %v1386
        %v1395 = vunpack.c.l.b16 %v1387
        %v1396 = vunpack.c.l.b16 %v1388
        %v1397 = vpack.c.b16 %v1394, %v1393
        %v1398 = vpack.c.b16 %v1396, %v1395
        %v1402 = vsel %vm571, %v1384, 0
        %1404 = vmatprep.subr.bf16.mxu0 0
        %1405 = vmatpush1.bf16.msra.mxu0 %v1397
        %1406 = vmatprep.subr.bf16.mxu0 0
        %1407 = vmatpush1.bf16.msra.mxu0 %v1398
        %1408 = vmatprep.subr.bf16.mxu0 0
        %1409 = vmatpush1.bf16.msra.mxu0 0
        %1410 = vmatprep.subr.bf16.mxu0 0
        %1411 = vmatpush1.bf16.msra.mxu0 0
        %1412 = vmatprep.subr.bf16.mxu0 0
        %1413 = vmatpush1.bf16.msra.mxu0 0
        %1414 = vmatprep.subr.bf16.mxu0 0
        %1415 = vmatpush1.bf16.msra.mxu0 0
        %1416 = vmatprep.subr.bf16.mxu0 0
        %1417 = vmatpush1.bf16.msra.mxu0 0
        %1418 = vmatprep.subr.bf16.mxu0 0
        %1419 = vmatpush1.bf16.msra.mxu0 0
        %1420 = vmatprep.subr.bf16.mxu0 0
        %1421 = vmatpush1.bf16.msra.mxu0 0
        %1422 = vmatprep.subr.bf16.mxu0 0
        %1423 = vmatpush1.bf16.msra.mxu0 0
        %1424 = vmatprep.subr.bf16.mxu0 0
        %1425 = vmatpush1.bf16.msra.mxu0 0
        %1426 = vmatprep.subr.bf16.mxu0 0
        %1427 = vmatpush1.bf16.msra.mxu0 0
        %1428 = vmatprep.subr.bf16.mxu0 0
        %1429 = vmatpush1.bf16.msra.mxu0 0
        %1430 = vmatprep.subr.bf16.mxu0 0
        %1431 = vmatpush1.bf16.msra.mxu0 0
        %1432 = vmatprep.subr.bf16.mxu0 0
        %1433 = vmatpush1.bf16.msra.mxu0 0
        %1434 = vmatprep.subr.bf16.mxu0 0
        %1435 = vmatpush1.bf16.msra.mxu0 0
        %1436 = vmatprep.mubr.bf16.mxu0 0
        %1437 = vmatmul.mubr.bf16.gmra.mrb[0].mxu0 %v1402
        %v1438 = vpop.f32.mrb[0].mxu0
        %v1439 = vadd.f32 0.0, %v1438
        %v1440 = vpop.f32.mrb[0].mxu0
        %v1441 = vpop.f32.mrb[0].mxu0
        %v1442 = vpop.f32.mrb[0].mxu0
        %1443 = vdwg.mxu0
        %1444 = vst.msk [vmem:[%s566] sm:$0xff] %vm571, %v1439
        %s1445 = sand.u32 %s310, 1
        %s1446 = scalar_lea.sflag [#allocation4], %s1445
        %s1447 = sand.u32 %s310, 1
        %s1448 = smul.addr %s1447, 8
        %s1449 = scalar_lea.vmem [#allocation16], %s1448
        // Predicated region
        $region101: #{tpu_custom_call.1} parent=67 // pred_check
          %p1450 = pneg %p320
        $region102: #{tpu_custom_call.1} parent=67 // pred_check_branch
          %1452 = sbr.rel (%p1450) target = $region104
        $region103: #{tpu_custom_call.1} parent=67 // pred_region
          %s1454 = ssub.s32 128, 128
          %1455 = vsyncadd %s1446, %s1454
          %s1456 = smul.addr %s35, 128
          %s1457 = scalar_lea.hbm %s12, %s1456
          %s1459 = sshll.u32 %s1449, 4
          %s1460 = int_to_ptr.vmem [resolvable:$true] %s1459
          %1462 = dma.vmem_to_hbm [thread:$0]  %s1460, 128, %s1457, %s1446
        $region104: #{tpu_custom_call.1} parent=67 // pred_fallthru
          _
      $region68: #{tpu_custom_call.1} parent=5 // pred_fallthru
        _
      %p1463 = scmp.le.s32.totalorder 2, %s30
      // Predicated region
      $region105: #{tpu_custom_call.1} parent=5 // pred_check
        %p1464 = pneg %p1463
      $region106: #{tpu_custom_call.1} parent=5 // pred_check_branch
        %1466 = sbr.rel (%p1464) target = $region108
      $region107: #{tpu_custom_call.1} parent=5 // pred_region
        %s1467 = ssub.s32 %s30, 2
        // Predicated region
        $region109: #{tpu_custom_call.1} parent=107 // pred_check
          %p1468 = pneg %p326
        $region110: #{tpu_custom_call.1} parent=107 // pred_check_branch
          %1470 = sbr.rel (%p1468) target = $region112
        $region111: #{tpu_custom_call.1} parent=107 // pred_region
          %s1471 = sand.u32 %s311, 1
          %s1472 = scalar_lea.sflag [#allocation4], %s1471
          %s1473 = sand.u32 %s311, 1
          %s1474 = smul.addr %s1473, 8
          %s1475 = scalar_lea.vmem [#allocation16], %s1474
          %1476 = dma.done %s1472, 128
        $region112: #{tpu_custom_call.1} parent=107 // pred_fallthru
          _
      $region108: #{tpu_custom_call.1} parent=5 // pred_fallthru
        _
    $region6: #{tpu_custom_call.1} parent=1 // loop_footer
      %s34 = sadd.s32 1, %s30
    $region7: #{tpu_custom_call.1} parent=1 // loop_footer_branch
      %29 = sbr.rel target = $region3
    $region8: #{tpu_custom_call.1} parent=1 // loop_exit
      _
    %1477 = vsyncpa [#allocation3], 1
    %s1478 = scalar_lea.sflag [#allocation3], 1
    %1479 = vsyncpa %s1478, 1
    %1480 = vsyncpa [#allocation6], 1
    %s1481 = scalar_lea.sflag [#allocation6], 1
    %1482 = vsyncpa %s1481, 1
    %1483 = vsyncpa [#allocation9], 1
    %1484 = vsyncpa [#allocation12], 1
    %1485 = vsyncpa [#allocation15], 1
    %1486 = vsyncpa [#allocation4], 1
    %s1487 = scalar_lea.sflag [#allocation4], 1
    %1488 = vsyncpa %s1487, 1

</llo_original>
